<compile_context>
chip_gen: v7x
topology: tpu7x:2x2x1
jax: 0.10.0
libtpu: 0.0.40
codegen_flags: <defaults>
</compile_context>

<pallas_src>
import jax
import jax.numpy as jnp
from jax.experimental import pallas as pl
from jax.experimental.pallas import tpu as pltpu


def socnn_kernel(x_ref, pm_ref, w_ref, b_ref, o_ref, buf_ref):
    # x_ref  : (TB*L, D)      f32  flattened embedding rows for TB batch elements
    # pm_ref : (TB*L, 2)      f32  combined 2-part piecewise mask (values 0 / 100)
    # w_ref  : (3, D, 2H)     bf16 conv taps, columns piece-interleaved (col 2h+p <- h)
    # b_ref  : (1, 2H)        f32  piece-interleaved bias
    # o_ref  : (TB, 2H)       f32  output rows == torch's (B, 2H) layout
    # buf_ref: (TB*L+16, D)   f32  VMEM scratch realizing the +/-1 L-shift (conv zero pad)
    M, D = x_ref.shape
    TB, H2 = o_ref.shape
    L = M // TB

    x = x_ref[...]                                            # (M, D)

    # ---- conv stencil shifts via zero-filled VMEM scratch (replaces jnp.pad in HBM) ----
    zpad = jnp.zeros((8, D), jnp.float32)
    buf_ref[pl.ds(0, 8), :] = zpad                            # aligned 8-row pads
    buf_ref[pl.ds(M + 8, 8), :] = zpad
    buf_ref[pl.ds(8, M), :] = x                               # aligned store at offset 8
    buf = buf_ref[...]                                        # (M+16, D)
    # row r = b*L + l; zero the shifted rows that wrap across sequence/batch edges
    pos = jax.lax.broadcasted_iota(jnp.int32, (M, 1), 0) % L
    x_prev = jnp.where(pos == 0, 0.0, buf[7:M + 7, :])        # x[b, l-1]  (0 at l == 0)
    x_next = jnp.where(pos == L - 1, 0.0, buf[9:M + 9, :])    # x[b, l+1]  (0 at l == L-1)

    # ---- conv: three taps accumulated into one f32 expression, bf16 MXU operands ----
    acc = (jnp.dot(x_prev.astype(jnp.bfloat16), w_ref[0], preferred_element_type=jnp.float32)
           + jnp.dot(x.astype(jnp.bfloat16), w_ref[1], preferred_element_type=jnp.float32)
           + jnp.dot(x_next.astype(jnp.bfloat16), w_ref[2], preferred_element_type=jnp.float32))

    # ---- add the piecewise mask, routed by output-column parity (col 2h+p -> piece p) ----
    pm = pm_ref[...]                                          # (M, 2)
    parity = jax.lax.broadcasted_iota(jnp.int32, (M, H2), 1) % 2
    acc = acc + jnp.where(parity == 0, pm[:, 0:1], pm[:, 1:2])            # (M, 2H)

    # ---- piecewise max-pool over each batch element's L rows -> one dense (TB, 2H) store ----
    rowi = jax.lax.broadcasted_iota(jnp.int32, (TB, H2), 0)
    pooled = jnp.zeros((TB, H2), jnp.float32)
    for b in range(TB):                                       # static unroll, TB <= 64
        seg = jnp.max(acc[b * L:(b + 1) * L, :], axis=0, keepdims=True)   # (1, 2H)
        pooled = jnp.where(rowi == b, seg, pooled)

    # bias is constant over L -> add after the pool; then torch's -100 and ReLU
    o_ref[...] = jnp.maximum(pooled + b_ref[...] - 100.0, 0.0)


def _choose_block_b(B, L, max_rows=1024, max_tb=64):
    """Batch elements per grid step: multiple of 8 (output sublane tiling), flattened
    slab capped at max_rows rows (VMEM / unroll), preferring >= 2 grid steps (v7x has
    two TensorCores). Falls back to the whole batch for tiny B."""
    cands = [t for t in range(8, min(B, max_tb) + 1, 8)
             if B % t == 0 and t * L <= max_rows]
    if not cands:
        return B
    for t in reversed(cands):
        if B // t >= 2:
            return t
    return cands[0]


def socnn_forward(embedding, mask, weight, bias, *, hidden_size, is_head=True, block_b=None):
    """embedding: (B, L, D) f32; mask: (B, L, 3); weight: (H, 1, 3, D); bias: (H,)."""
    B, L, D = embedding.shape
    H = hidden_size

    # --- plain-JAX glue (no padded HBM copy of the embedding, no output transpose) ---
    if is_head:
        pm = jnp.stack([mask[:, :, 0], mask[:, :, 1] + mask[:, :, 2]], axis=-1)
    else:
        pm = jnp.stack([mask[:, :, 0] + mask[:, :, 1], mask[:, :, 2]], axis=-1)
    pm = pm.astype(jnp.float32).reshape(B * L, 2)
    x_flat = embedding.astype(jnp.float32).reshape(B * L, D)        # metadata-only reshape

    # conv taps w3[k, d, h] = torch_weight[h, 0, k, d]; duplicate columns so column 2h+p
    # carries hidden unit h -> the kernel's matmul directly produces torch's h-major /
    # piece-minor output columns (lane-dense (TB, 2H) store, no transpose afterwards).
    w3 = jnp.transpose(weight[:, 0, :, :], (1, 2, 0))               # (3, D, H)
    w_int = jnp.repeat(w3, 2, axis=2).astype(jnp.bfloat16)          # (3, D, 2H)
    b_int = jnp.repeat(bias.astype(jnp.float32), 2).reshape(1, 2 * H)

    TB = _choose_block_b(B, L) if block_b is None else block_b
    assert B % TB == 0, "batch block must divide batch"
    M = TB * L

    out = pl.pallas_call(
        socnn_kernel,
        out_shape=jax.ShapeDtypeStruct((B, 2 * H), jnp.float32),
        grid_spec=pltpu.PrefetchScalarGridSpec(
            num_scalar_prefetch=0,
            grid=(B // TB,),
            in_specs=[
                pl.BlockSpec((M, D), lambda i: (i, 0)),             # embedding slab
                pl.BlockSpec((M, 2), lambda i: (i, 0)),             # piecewise mask
                pl.BlockSpec((3, D, 2 * H), lambda i: (0, 0, 0)),   # conv taps (resident)
                pl.BlockSpec((1, 2 * H), lambda i: (0, 0)),         # bias (resident)
            ],
            out_specs=pl.BlockSpec((TB, 2 * H), lambda i: (i, 0)),
            scratch_shapes=[pltpu.VMEM((M + 16, D), jnp.float32)],
        ),
        compiler_params=pltpu.CompilerParams(
            dimension_semantics=("parallel",),
            vmem_limit_bytes=32 * 1024 * 1024),
    )(x_flat, pm, w_int, b_int)
    return out


def socnn_reference(embedding, mask, weight, bias, *, hidden_size, is_head=True):
    """Pure-JAX (f32) reference mirroring the PyTorch module, for verification."""
    B, L, D = embedding.shape
    H = hidden_size
    xp = jnp.pad(embedding, ((0, 0), (1, 1), (0, 0)))
    w3 = jnp.transpose(weight[:, 0, :, :], (1, 2, 0))               # (3, D, H)
    conv = sum(jnp.einsum('bld,dh->blh', xp[:, k:k + L], w3[k]) for k in range(3))
    conv = conv + bias[None, None, :]                                # (B, L, H)
    if is_head:
        pm = jnp.stack([mask[:, :, 0], mask[:, :, 1] + mask[:, :, 2]], axis=-1)
    else:
        pm = jnp.stack([mask[:, :, 0] + mask[:, :, 1], mask[:, :, 2]], axis=-1)
    pooled = jnp.max(conv[:, :, :, None] + pm[:, :, None, :], axis=1) - 100.0   # (B, H, 2)
    return jax.nn.relu(pooled.reshape(B, 2 * H))


if __name__ == "__main__":
    B, L, D, H = 32, 16, 16, 32   # batch, seq len, model_dim, hidden_size

    key = jax.random.PRNGKey(0)
    k_emb, k_w, k_b = jax.random.split(key, 3)

    embedding = jax.random.normal(k_emb, (B, L, D), dtype=jnp.float32)

    # Conv2d(1, H, kernel=(3, D)) parameters (deterministic synthetic init).
    fan_in = 1 * 3 * D
    bound = 1.0 / (fan_in ** 0.5)
    weight = jax.random.uniform(k_w, (H, 1, 3, D), jnp.float32, -bound, bound)
    bias = jax.random.uniform(k_b, (H,), jnp.float32, -bound, bound)

    # Synthetic PCNN-style piecewise mask: 100 for a token's piece, 0 elsewhere.
    piece = jnp.clip(jnp.arange(L) * 3 // L, 0, 2)                     # (L,)
    mask = (jax.nn.one_hot(piece, 3) * 100.0)[None].repeat(B, axis=0)  # (B, L, 3)

    out = socnn_forward(embedding, mask, weight, bias, hidden_size=H, is_head=True)
    out = jax.block_until_ready(out)

    ref = socnn_reference(embedding, mask, weight, bias, hidden_size=H, is_head=True)
    assert out.shape == (B, 2 * H)
    # bf16 MXU operands (f32 accumulation) -> loosened tolerance vs. the f32 reference.
    assert jnp.allclose(out, ref, atol=5e-2, rtol=5e-2), "mismatch vs reference"

    print("KERNEL_OK")
</pallas_src>

<mosaic_0001>
module attributes {stable_mosaic.version = 11 : i64} {
  func.func @socnn_kernel(%arg0: i32, %arg1: memref<256x16xf32, #tpu.memory_space<vmem>>, %arg2: memref<256x2xf32, #tpu.memory_space<vmem>>, %arg3: memref<3x16x64xbf16, #tpu.memory_space<vmem>>, %arg4: memref<1x64xf32, #tpu.memory_space<vmem>>, %arg5: memref<16x64xf32, #tpu.memory_space<vmem>>, %arg6: memref<272x16xf32, #tpu.memory_space<vmem>>) attributes {dimension_semantics = [#tpu.dimension_semantics<parallel>], iteration_bounds = array<i64: 2>, scalar_prefetch = 0 : i64, scratch_operands = 1 : i64, tpu.core_type = #tpu.core_type<tc>, window_params = [{transform_indices = @transform_0, window_bounds = array<i64: 256, 16>}, {transform_indices = @transform_1, window_bounds = array<i64: 256, 2>}, {pipeline_mode = #tpu.pipeline_mode<synchronous>, transform_indices = @transform_2, window_bounds = array<i64: 3, 16, 64>}, {pipeline_mode = #tpu.pipeline_mode<synchronous>, transform_indices = @transform_3, window_bounds = array<i64: 1, 64>}, {transform_indices = @transform_4, window_bounds = array<i64: 16, 64>}]} {
    %c0 = arith.constant 0 : index
    %c0_0 = arith.constant 0 : index
    %0 = vector.load %arg1[%c0, %c0_0] : memref<256x16xf32, #tpu.memory_space<vmem>>, vector<256x16xf32>
    %cst = arith.constant 0.000000e+00 : f32
    %1 = vector.broadcast %cst : f32 to vector<8x16xf32>
    %c0_1 = arith.constant 0 : index
    %c0_2 = arith.constant 0 : index
    %2 = vector.load %arg6[%c0_1, %c0_2] : memref<272x16xf32, #tpu.memory_space<vmem>>, vector<8x16xf32>
    tpu.vector_store %arg6[%c0_1, %c0_2], %1 {strides = array<i32>} : memref<272x16xf32, #tpu.memory_space<vmem>>, vector<8x16xf32>,
    %c264 = arith.constant 264 : index
    %c0_3 = arith.constant 0 : index
    %3 = vector.load %arg6[%c264, %c0_3] : memref<272x16xf32, #tpu.memory_space<vmem>>, vector<8x16xf32>
    tpu.vector_store %arg6[%c264, %c0_3], %1 {strides = array<i32>} : memref<272x16xf32, #tpu.memory_space<vmem>>, vector<8x16xf32>,
    %c8 = arith.constant 8 : index
    %c0_4 = arith.constant 0 : index
    %4 = vector.load %arg6[%c8, %c0_4] : memref<272x16xf32, #tpu.memory_space<vmem>>, vector<256x16xf32>
    tpu.vector_store %arg6[%c8, %c0_4], %0 {strides = array<i32>} : memref<272x16xf32, #tpu.memory_space<vmem>>, vector<256x16xf32>,
    %c0_5 = arith.constant 0 : index
    %c0_6 = arith.constant 0 : index
    %5 = vector.load %arg6[%c0_5, %c0_6] : memref<272x16xf32, #tpu.memory_space<vmem>>, vector<272x16xf32>
    %6 = tpu.iota {dimensions = array<i32: 0>} : vector<256x1xi32>
    %c16_i32 = arith.constant 16 : i32
    %c0_i32 = arith.constant 0 : i32
    %7 = arith.cmpi eq, %c16_i32, %c0_i32 : i32
    %c1_i32 = arith.constant 1 : i32
    %8 = arith.select %7, %c1_i32, %c16_i32 : i32
    %9 = vector.broadcast %8 : i32 to vector<256x1xi32>
    %10 = arith.remsi %6, %9 : vector<256x1xi32>
    %c0_i32_7 = arith.constant 0 : i32
    %11 = vector.broadcast %c0_i32_7 : i32 to vector<256x1xi32>
    %12 = arith.cmpi ne, %10, %11 : vector<256x1xi32>
    %c0_i32_8 = arith.constant 0 : i32
    %13 = vector.broadcast %c0_i32_8 : i32 to vector<256x1xi32>
    %14 = arith.cmpi slt, %10, %13 : vector<256x1xi32>
    %c0_i32_9 = arith.constant 0 : i32
    %15 = arith.cmpi slt, %8, %c0_i32_9 : i32
    %16 = vector.broadcast %15 : i1 to vector<256x1xi1>
    %17 = vector.broadcast %16 : vector<256x1xi1> to vector<256x1xi1>
    %18 = arith.xori %14, %17 : vector<256x1xi1>
    %19 = arith.andi %18, %12 : vector<256x1xi1>
    %20 = vector.broadcast %8 : i32 to vector<256x1xi32>
    %21 = arith.addi %10, %20 : vector<256x1xi32>
    %22 = arith.select %19, %21, %10 : vector<256x1xi1>, vector<256x1xi32>
    %c0_i32_10 = arith.constant 0 : i32
    %23 = vector.broadcast %c0_i32_10 : i32 to vector<256x1xi32>
    %24 = arith.cmpi eq, %22, %23 : vector<256x1xi32>
    %25 = vector.extract_strided_slice %5 {offsets = [7, 0], sizes = [256, 16], strides = [1, 1]} : vector<272x16xf32> to vector<256x16xf32>
    %cst_11 = arith.constant 0.000000e+00 : f32
    %26 = vector.shape_cast %24 : vector<256x1xi1> to vector<256x1xi1>
    %27 = vector.broadcast %26 : vector<256x1xi1> to vector<256x16xi1>
    %28 = vector.broadcast %cst_11 : f32 to vector<256x16xf32>
    %29 = arith.select %27, %28, %25 : vector<256x16xi1>, vector<256x16xf32>
    %c15_i32 = arith.constant 15 : i32
    %30 = vector.broadcast %c15_i32 : i32 to vector<256x1xi32>
    %31 = arith.cmpi eq, %22, %30 : vector<256x1xi32>
    %32 = vector.extract_strided_slice %5 {offsets = [9, 0], sizes = [256, 16], strides = [1, 1]} : vector<272x16xf32> to vector<256x16xf32>
    %cst_12 = arith.constant 0.000000e+00 : f32
    %33 = vector.shape_cast %31 : vector<256x1xi1> to vector<256x1xi1>
    %34 = vector.broadcast %33 : vector<256x1xi1> to vector<256x16xi1>
    %35 = vector.broadcast %cst_12 : f32 to vector<256x16xf32>
    %36 = arith.select %34, %35, %32 : vector<256x16xi1>, vector<256x16xf32>
    %37 = arith.truncf %29 : vector<256x16xf32> to vector<256x16xbf16>
    %c0_13 = arith.constant 0 : index
    %c0_14 = arith.constant 0 : index
    %c0_15 = arith.constant 0 : index
    %38 = vector.load %arg3[%c0_13, %c0_14, %c0_15] : memref<3x16x64xbf16, #tpu.memory_space<vmem>>, vector<1x16x64xbf16>
    %39 = vector.shape_cast %38 : vector<1x16x64xbf16> to vector<16x64xbf16>
    %cst_16 = arith.constant dense<0.000000e+00> : vector<256x64xf32>
    %40 = tpu.matmul %37, %39, %cst_16 {dimension_numbers = #tpu.dot_dimension_numbers<[1], [0], [0], [1], [0, 0, 1, 1], [], []>} : vector<256x16xbf16>, vector<16x64xbf16>, vector<256x64xf32> -> vector<256x64xf32>
    %41 = arith.truncf %0 : vector<256x16xf32> to vector<256x16xbf16>
    %c1 = arith.constant 1 : index
    %c0_17 = arith.constant 0 : index
    %c0_18 = arith.constant 0 : index
    %42 = vector.load %arg3[%c1, %c0_17, %c0_18] : memref<3x16x64xbf16, #tpu.memory_space<vmem>>, vector<1x16x64xbf16>
    %43 = vector.shape_cast %42 : vector<1x16x64xbf16> to vector<16x64xbf16>
    %cst_19 = arith.constant dense<0.000000e+00> : vector<256x64xf32>
    %44 = tpu.matmul %41, %43, %cst_19 {dimension_numbers = #tpu.dot_dimension_numbers<[1], [0], [0], [1], [0, 0, 1, 1], [], []>} : vector<256x16xbf16>, vector<16x64xbf16>, vector<256x64xf32> -> vector<256x64xf32>
    %45 = arith.addf %40, %44 : vector<256x64xf32>
    %46 = arith.truncf %36 : vector<256x16xf32> to vector<256x16xbf16>
    %c2 = arith.constant 2 : index
    %c0_20 = arith.constant 0 : index
    %c0_21 = arith.constant 0 : index
    %47 = vector.load %arg3[%c2, %c0_20, %c0_21] : memref<3x16x64xbf16, #tpu.memory_space<vmem>>, vector<1x16x64xbf16>
    %48 = vector.shape_cast %47 : vector<1x16x64xbf16> to vector<16x64xbf16>
    %cst_22 = arith.constant dense<0.000000e+00> : vector<256x64xf32>
    %49 = tpu.matmul %46, %48, %cst_22 {dimension_numbers = #tpu.dot_dimension_numbers<[1], [0], [0], [1], [0, 0, 1, 1], [], []>} : vector<256x16xbf16>, vector<16x64xbf16>, vector<256x64xf32> -> vector<256x64xf32>
    %50 = arith.addf %45, %49 : vector<256x64xf32>
    %c0_23 = arith.constant 0 : index
    %c0_24 = arith.constant 0 : index
    %51 = vector.load %arg2[%c0_23, %c0_24] : memref<256x2xf32, #tpu.memory_space<vmem>>, vector<256x2xf32>
    %52 = tpu.iota {dimensions = array<i32: 1>} : vector<256x64xi32>
    %c2_i32 = arith.constant 2 : i32
    %c0_i32_25 = arith.constant 0 : i32
    %53 = arith.cmpi eq, %c2_i32, %c0_i32_25 : i32
    %c1_i32_26 = arith.constant 1 : i32
    %54 = arith.select %53, %c1_i32_26, %c2_i32 : i32
    %55 = vector.broadcast %54 : i32 to vector<256x64xi32>
    %56 = arith.remsi %52, %55 : vector<256x64xi32>
    %c0_i32_27 = arith.constant 0 : i32
    %57 = vector.broadcast %c0_i32_27 : i32 to vector<256x64xi32>
    %58 = arith.cmpi ne, %56, %57 : vector<256x64xi32>
    %c0_i32_28 = arith.constant 0 : i32
    %59 = vector.broadcast %c0_i32_28 : i32 to vector<256x64xi32>
    %60 = arith.cmpi slt, %56, %59 : vector<256x64xi32>
    %c0_i32_29 = arith.constant 0 : i32
    %61 = arith.cmpi slt, %54, %c0_i32_29 : i32
    %62 = vector.broadcast %61 : i1 to vector<256x64xi1>
    %63 = vector.broadcast %62 : vector<256x64xi1> to vector<256x64xi1>
    %64 = arith.xori %60, %63 : vector<256x64xi1>
    %65 = arith.andi %64, %58 : vector<256x64xi1>
    %66 = vector.broadcast %54 : i32 to vector<256x64xi32>
    %67 = arith.addi %56, %66 : vector<256x64xi32>
    %68 = arith.select %65, %67, %56 : vector<256x64xi1>, vector<256x64xi32>
    %c0_i32_30 = arith.constant 0 : i32
    %69 = vector.broadcast %c0_i32_30 : i32 to vector<256x64xi32>
    %70 = arith.cmpi eq, %68, %69 : vector<256x64xi32>
    %71 = vector.extract_strided_slice %51 {offsets = [0, 0], sizes = [256, 1], strides = [1, 1]} : vector<256x2xf32> to vector<256x1xf32>
    %72 = vector.extract_strided_slice %51 {offsets = [0, 1], sizes = [256, 1], strides = [1, 1]} : vector<256x2xf32> to vector<256x1xf32>
    %73 = vector.shape_cast %71 : vector<256x1xf32> to vector<256x1xf32>
    %74 = vector.broadcast %73 : vector<256x1xf32> to vector<256x64xf32>
    %75 = vector.shape_cast %72 : vector<256x1xf32> to vector<256x1xf32>
    %76 = vector.broadcast %75 : vector<256x1xf32> to vector<256x64xf32>
    %77 = arith.select %70, %74, %76 : vector<256x64xi1>, vector<256x64xf32>
    %78 = arith.addf %50, %77 : vector<256x64xf32>
    %79 = tpu.iota {dimensions = array<i32: 0>} : vector<16x64xi32>
    %cst_31 = arith.constant 0.000000e+00 : f32
    %80 = vector.broadcast %cst_31 : f32 to vector<16x64xf32>
    %81 = vector.extract_strided_slice %78 {offsets = [0, 0], sizes = [16, 64], strides = [1, 1]} : vector<256x64xf32> to vector<16x64xf32>
    %cst_32 = arith.constant dense<0xFF800000> : vector<64xf32>
    %82 = vector.multi_reduction <maximumf>, %81, %cst_32 [0] : vector<16x64xf32> to vector<64xf32>
    %83 = vector.shape_cast %82 : vector<64xf32> to vector<1x64xf32>
    %c0_i32_33 = arith.constant 0 : i32
    %84 = vector.broadcast %c0_i32_33 : i32 to vector<16x64xi32>
    %85 = arith.cmpi eq, %79, %84 : vector<16x64xi32>
    %86 = vector.shape_cast %83 : vector<1x64xf32> to vector<1x64xf32>
    %87 = vector.broadcast %86 : vector<1x64xf32> to vector<16x64xf32>
    %88 = arith.select %85, %87, %80 : vector<16x64xi1>, vector<16x64xf32>
    %89 = vector.extract_strided_slice %78 {offsets = [16, 0], sizes = [16, 64], strides = [1, 1]} : vector<256x64xf32> to vector<16x64xf32>
    %cst_34 = arith.constant dense<0xFF800000> : vector<64xf32>
    %90 = vector.multi_reduction <maximumf>, %89, %cst_34 [0] : vector<16x64xf32> to vector<64xf32>
    %91 = vector.shape_cast %90 : vector<64xf32> to vector<1x64xf32>
    %c1_i32_35 = arith.constant 1 : i32
    %92 = vector.broadcast %c1_i32_35 : i32 to vector<16x64xi32>
    %93 = arith.cmpi eq, %79, %92 : vector<16x64xi32>
    %94 = vector.shape_cast %91 : vector<1x64xf32> to vector<1x64xf32>
    %95 = vector.broadcast %94 : vector<1x64xf32> to vector<16x64xf32>
    %96 = arith.select %93, %95, %88 : vector<16x64xi1>, vector<16x64xf32>
    %97 = vector.extract_strided_slice %78 {offsets = [32, 0], sizes = [16, 64], strides = [1, 1]} : vector<256x64xf32> to vector<16x64xf32>
    %cst_36 = arith.constant dense<0xFF800000> : vector<64xf32>
    %98 = vector.multi_reduction <maximumf>, %97, %cst_36 [0] : vector<16x64xf32> to vector<64xf32>
    %99 = vector.shape_cast %98 : vector<64xf32> to vector<1x64xf32>
    %c2_i32_37 = arith.constant 2 : i32
    %100 = vector.broadcast %c2_i32_37 : i32 to vector<16x64xi32>
    %101 = arith.cmpi eq, %79, %100 : vector<16x64xi32>
    %102 = vector.shape_cast %99 : vector<1x64xf32> to vector<1x64xf32>
    %103 = vector.broadcast %102 : vector<1x64xf32> to vector<16x64xf32>
    %104 = arith.select %101, %103, %96 : vector<16x64xi1>, vector<16x64xf32>
    %105 = vector.extract_strided_slice %78 {offsets = [48, 0], sizes = [16, 64], strides = [1, 1]} : vector<256x64xf32> to vector<16x64xf32>
    %cst_38 = arith.constant dense<0xFF800000> : vector<64xf32>
    %106 = vector.multi_reduction <maximumf>, %105, %cst_38 [0] : vector<16x64xf32> to vector<64xf32>
    %107 = vector.shape_cast %106 : vector<64xf32> to vector<1x64xf32>
    %c3_i32 = arith.constant 3 : i32
    %108 = vector.broadcast %c3_i32 : i32 to vector<16x64xi32>
    %109 = arith.cmpi eq, %79, %108 : vector<16x64xi32>
    %110 = vector.shape_cast %107 : vector<1x64xf32> to vector<1x64xf32>
    %111 = vector.broadcast %110 : vector<1x64xf32> to vector<16x64xf32>
    %112 = arith.select %109, %111, %104 : vector<16x64xi1>, vector<16x64xf32>
    %113 = vector.extract_strided_slice %78 {offsets = [64, 0], sizes = [16, 64], strides = [1, 1]} : vector<256x64xf32> to vector<16x64xf32>
    %cst_39 = arith.constant dense<0xFF800000> : vector<64xf32>
    %114 = vector.multi_reduction <maximumf>, %113, %cst_39 [0] : vector<16x64xf32> to vector<64xf32>
    %115 = vector.shape_cast %114 : vector<64xf32> to vector<1x64xf32>
    %c4_i32 = arith.constant 4 : i32
    %116 = vector.broadcast %c4_i32 : i32 to vector<16x64xi32>
    %117 = arith.cmpi eq, %79, %116 : vector<16x64xi32>
    %118 = vector.shape_cast %115 : vector<1x64xf32> to vector<1x64xf32>
    %119 = vector.broadcast %118 : vector<1x64xf32> to vector<16x64xf32>
    %120 = arith.select %117, %119, %112 : vector<16x64xi1>, vector<16x64xf32>
    %121 = vector.extract_strided_slice %78 {offsets = [80, 0], sizes = [16, 64], strides = [1, 1]} : vector<256x64xf32> to vector<16x64xf32>
    %cst_40 = arith.constant dense<0xFF800000> : vector<64xf32>
    %122 = vector.multi_reduction <maximumf>, %121, %cst_40 [0] : vector<16x64xf32> to vector<64xf32>
    %123 = vector.shape_cast %122 : vector<64xf32> to vector<1x64xf32>
    %c5_i32 = arith.constant 5 : i32
    %124 = vector.broadcast %c5_i32 : i32 to vector<16x64xi32>
    %125 = arith.cmpi eq, %79, %124 : vector<16x64xi32>
    %126 = vector.shape_cast %123 : vector<1x64xf32> to vector<1x64xf32>
    %127 = vector.broadcast %126 : vector<1x64xf32> to vector<16x64xf32>
    %128 = arith.select %125, %127, %120 : vector<16x64xi1>, vector<16x64xf32>
    %129 = vector.extract_strided_slice %78 {offsets = [96, 0], sizes = [16, 64], strides = [1, 1]} : vector<256x64xf32> to vector<16x64xf32>
    %cst_41 = arith.constant dense<0xFF800000> : vector<64xf32>
    %130 = vector.multi_reduction <maximumf>, %129, %cst_41 [0] : vector<16x64xf32> to vector<64xf32>
    %131 = vector.shape_cast %130 : vector<64xf32> to vector<1x64xf32>
    %c6_i32 = arith.constant 6 : i32
    %132 = vector.broadcast %c6_i32 : i32 to vector<16x64xi32>
    %133 = arith.cmpi eq, %79, %132 : vector<16x64xi32>
    %134 = vector.shape_cast %131 : vector<1x64xf32> to vector<1x64xf32>
    %135 = vector.broadcast %134 : vector<1x64xf32> to vector<16x64xf32>
    %136 = arith.select %133, %135, %128 : vector<16x64xi1>, vector<16x64xf32>
    %137 = vector.extract_strided_slice %78 {offsets = [112, 0], sizes = [16, 64], strides = [1, 1]} : vector<256x64xf32> to vector<16x64xf32>
    %cst_42 = arith.constant dense<0xFF800000> : vector<64xf32>
    %138 = vector.multi_reduction <maximumf>, %137, %cst_42 [0] : vector<16x64xf32> to vector<64xf32>
    %139 = vector.shape_cast %138 : vector<64xf32> to vector<1x64xf32>
    %c7_i32 = arith.constant 7 : i32
    %140 = vector.broadcast %c7_i32 : i32 to vector<16x64xi32>
    %141 = arith.cmpi eq, %79, %140 : vector<16x64xi32>
    %142 = vector.shape_cast %139 : vector<1x64xf32> to vector<1x64xf32>
    %143 = vector.broadcast %142 : vector<1x64xf32> to vector<16x64xf32>
    %144 = arith.select %141, %143, %136 : vector<16x64xi1>, vector<16x64xf32>
    %145 = vector.extract_strided_slice %78 {offsets = [128, 0], sizes = [16, 64], strides = [1, 1]} : vector<256x64xf32> to vector<16x64xf32>
    %cst_43 = arith.constant dense<0xFF800000> : vector<64xf32>
    %146 = vector.multi_reduction <maximumf>, %145, %cst_43 [0] : vector<16x64xf32> to vector<64xf32>
    %147 = vector.shape_cast %146 : vector<64xf32> to vector<1x64xf32>
    %c8_i32 = arith.constant 8 : i32
    %148 = vector.broadcast %c8_i32 : i32 to vector<16x64xi32>
    %149 = arith.cmpi eq, %79, %148 : vector<16x64xi32>
    %150 = vector.shape_cast %147 : vector<1x64xf32> to vector<1x64xf32>
    %151 = vector.broadcast %150 : vector<1x64xf32> to vector<16x64xf32>
    %152 = arith.select %149, %151, %144 : vector<16x64xi1>, vector<16x64xf32>
    %153 = vector.extract_strided_slice %78 {offsets = [144, 0], sizes = [16, 64], strides = [1, 1]} : vector<256x64xf32> to vector<16x64xf32>
    %cst_44 = arith.constant dense<0xFF800000> : vector<64xf32>
    %154 = vector.multi_reduction <maximumf>, %153, %cst_44 [0] : vector<16x64xf32> to vector<64xf32>
    %155 = vector.shape_cast %154 : vector<64xf32> to vector<1x64xf32>
    %c9_i32 = arith.constant 9 : i32
    %156 = vector.broadcast %c9_i32 : i32 to vector<16x64xi32>
    %157 = arith.cmpi eq, %79, %156 : vector<16x64xi32>
    %158 = vector.shape_cast %155 : vector<1x64xf32> to vector<1x64xf32>
    %159 = vector.broadcast %158 : vector<1x64xf32> to vector<16x64xf32>
    %160 = arith.select %157, %159, %152 : vector<16x64xi1>, vector<16x64xf32>
    %161 = vector.extract_strided_slice %78 {offsets = [160, 0], sizes = [16, 64], strides = [1, 1]} : vector<256x64xf32> to vector<16x64xf32>
    %cst_45 = arith.constant dense<0xFF800000> : vector<64xf32>
    %162 = vector.multi_reduction <maximumf>, %161, %cst_45 [0] : vector<16x64xf32> to vector<64xf32>
    %163 = vector.shape_cast %162 : vector<64xf32> to vector<1x64xf32>
    %c10_i32 = arith.constant 10 : i32
    %164 = vector.broadcast %c10_i32 : i32 to vector<16x64xi32>
    %165 = arith.cmpi eq, %79, %164 : vector<16x64xi32>
    %166 = vector.shape_cast %163 : vector<1x64xf32> to vector<1x64xf32>
    %167 = vector.broadcast %166 : vector<1x64xf32> to vector<16x64xf32>
    %168 = arith.select %165, %167, %160 : vector<16x64xi1>, vector<16x64xf32>
    %169 = vector.extract_strided_slice %78 {offsets = [176, 0], sizes = [16, 64], strides = [1, 1]} : vector<256x64xf32> to vector<16x64xf32>
    %cst_46 = arith.constant dense<0xFF800000> : vector<64xf32>
    %170 = vector.multi_reduction <maximumf>, %169, %cst_46 [0] : vector<16x64xf32> to vector<64xf32>
    %171 = vector.shape_cast %170 : vector<64xf32> to vector<1x64xf32>
    %c11_i32 = arith.constant 11 : i32
    %172 = vector.broadcast %c11_i32 : i32 to vector<16x64xi32>
    %173 = arith.cmpi eq, %79, %172 : vector<16x64xi32>
    %174 = vector.shape_cast %171 : vector<1x64xf32> to vector<1x64xf32>
    %175 = vector.broadcast %174 : vector<1x64xf32> to vector<16x64xf32>
    %176 = arith.select %173, %175, %168 : vector<16x64xi1>, vector<16x64xf32>
    %177 = vector.extract_strided_slice %78 {offsets = [192, 0], sizes = [16, 64], strides = [1, 1]} : vector<256x64xf32> to vector<16x64xf32>
    %cst_47 = arith.constant dense<0xFF800000> : vector<64xf32>
    %178 = vector.multi_reduction <maximumf>, %177, %cst_47 [0] : vector<16x64xf32> to vector<64xf32>
    %179 = vector.shape_cast %178 : vector<64xf32> to vector<1x64xf32>
    %c12_i32 = arith.constant 12 : i32
    %180 = vector.broadcast %c12_i32 : i32 to vector<16x64xi32>
    %181 = arith.cmpi eq, %79, %180 : vector<16x64xi32>
    %182 = vector.shape_cast %179 : vector<1x64xf32> to vector<1x64xf32>
    %183 = vector.broadcast %182 : vector<1x64xf32> to vector<16x64xf32>
    %184 = arith.select %181, %183, %176 : vector<16x64xi1>, vector<16x64xf32>
    %185 = vector.extract_strided_slice %78 {offsets = [208, 0], sizes = [16, 64], strides = [1, 1]} : vector<256x64xf32> to vector<16x64xf32>
    %cst_48 = arith.constant dense<0xFF800000> : vector<64xf32>
    %186 = vector.multi_reduction <maximumf>, %185, %cst_48 [0] : vector<16x64xf32> to vector<64xf32>
    %187 = vector.shape_cast %186 : vector<64xf32> to vector<1x64xf32>
    %c13_i32 = arith.constant 13 : i32
    %188 = vector.broadcast %c13_i32 : i32 to vector<16x64xi32>
    %189 = arith.cmpi eq, %79, %188 : vector<16x64xi32>
    %190 = vector.shape_cast %187 : vector<1x64xf32> to vector<1x64xf32>
    %191 = vector.broadcast %190 : vector<1x64xf32> to vector<16x64xf32>
    %192 = arith.select %189, %191, %184 : vector<16x64xi1>, vector<16x64xf32>
    %193 = vector.extract_strided_slice %78 {offsets = [224, 0], sizes = [16, 64], strides = [1, 1]} : vector<256x64xf32> to vector<16x64xf32>
    %cst_49 = arith.constant dense<0xFF800000> : vector<64xf32>
    %194 = vector.multi_reduction <maximumf>, %193, %cst_49 [0] : vector<16x64xf32> to vector<64xf32>
    %195 = vector.shape_cast %194 : vector<64xf32> to vector<1x64xf32>
    %c14_i32 = arith.constant 14 : i32
    %196 = vector.broadcast %c14_i32 : i32 to vector<16x64xi32>
    %197 = arith.cmpi eq, %79, %196 : vector<16x64xi32>
    %198 = vector.shape_cast %195 : vector<1x64xf32> to vector<1x64xf32>
    %199 = vector.broadcast %198 : vector<1x64xf32> to vector<16x64xf32>
    %200 = arith.select %197, %199, %192 : vector<16x64xi1>, vector<16x64xf32>
    %201 = vector.extract_strided_slice %78 {offsets = [240, 0], sizes = [16, 64], strides = [1, 1]} : vector<256x64xf32> to vector<16x64xf32>
    %cst_50 = arith.constant dense<0xFF800000> : vector<64xf32>
    %202 = vector.multi_reduction <maximumf>, %201, %cst_50 [0] : vector<16x64xf32> to vector<64xf32>
    %203 = vector.shape_cast %202 : vector<64xf32> to vector<1x64xf32>
    %c15_i32_51 = arith.constant 15 : i32
    %204 = vector.broadcast %c15_i32_51 : i32 to vector<16x64xi32>
    %205 = arith.cmpi eq, %79, %204 : vector<16x64xi32>
    %206 = vector.shape_cast %203 : vector<1x64xf32> to vector<1x64xf32>
    %207 = vector.broadcast %206 : vector<1x64xf32> to vector<16x64xf32>
    %208 = arith.select %205, %207, %200 : vector<16x64xi1>, vector<16x64xf32>
    %c0_52 = arith.constant 0 : index
    %c0_53 = arith.constant 0 : index
    %209 = vector.load %arg4[%c0_52, %c0_53] : memref<1x64xf32, #tpu.memory_space<vmem>>, vector<1x64xf32>
    %210 = vector.broadcast %209 : vector<1x64xf32> to vector<16x64xf32>
    %211 = arith.addf %208, %210 : vector<16x64xf32>
    %cst_54 = arith.constant 1.000000e+02 : f32
    %212 = vector.broadcast %cst_54 : f32 to vector<16x64xf32>
    %213 = arith.subf %211, %212 : vector<16x64xf32>
    %cst_55 = arith.constant 0.000000e+00 : f32
    %214 = vector.broadcast %cst_55 : f32 to vector<16x64xf32>
    %215 = arith.maximumf %213, %214 : vector<16x64xf32>
    %c0_56 = arith.constant 0 : index
    %c0_57 = arith.constant 0 : index
    %216 = vector.load %arg5[%c0_56, %c0_57] : memref<16x64xf32, #tpu.memory_space<vmem>>, vector<16x64xf32>
    tpu.vector_store %arg5[%c0_56, %c0_57], %215 {strides = array<i32>} : memref<16x64xf32, #tpu.memory_space<vmem>>, vector<16x64xf32>,
    return
  }
  func.func @transform_0(%arg0: i32) -> (i32, i32) {
    %c0_i32 = arith.constant 0 : i32
    %c0_i32_0 = arith.constant 0 : i32
    return %arg0, %c0_i32 : i32, i32
  }
  func.func @transform_1(%arg0: i32) -> (i32, i32) {
    %c0_i32 = arith.constant 0 : i32
    %c0_i32_0 = arith.constant 0 : i32
    return %arg0, %c0_i32 : i32, i32
  }
  func.func @transform_2(%arg0: i32) -> (i32, i32, i32) {
    %c0_i32 = arith.constant 0 : i32
    %c0_i32_0 = arith.constant 0 : i32
    %c0_i32_1 = arith.constant 0 : i32
    %c0_i32_2 = arith.constant 0 : i32
    return %c0_i32, %c0_i32_0, %c0_i32_1 : i32, i32, i32
  }
  func.func @transform_3(%arg0: i32) -> (i32, i32) {
    %c0_i32 = arith.constant 0 : i32
    %c0_i32_0 = arith.constant 0 : i32
    %c0_i32_1 = arith.constant 0 : i32
    return %c0_i32, %c0_i32_0 : i32, i32
  }
  func.func @transform_4(%arg0: i32) -> (i32, i32) {
    %c0_i32 = arith.constant 0 : i32
    %c0_i32_0 = arith.constant 0 : i32
    return %arg0, %c0_i32 : i32, i32
  }
}

</mosaic_0001>

<llo_original>
// kernel: tpu_custom_call.1
$region0: #{tpu_custom_call.1}
  #allocation0 [shape = 'u32[]', space=smem, size = 0x4, offset = 0x4, fixed_abs, tag = 'smem constant byte address 0x4 - core index']
  #allocation1 [shape = 'u32[144,128]{1,0:T(1,128)}', space=vmem, size = 0x12000, scoped, tag = 'internal scratch']
  #allocation2 [shape = 'f32[272,16]{1,0:T(8,128)}', space=vmem, size = 0x22000, scoped, tag = 'scratch operand']
  %s0 = inlined_call_operand.vmem [shape: f32[512,16], index: 0, kind: input, shape index: {}]
  %s1 = inlined_call_operand.vmem [shape: f32[512,2], index: 1, kind: input, shape index: {}]
  %s2 = inlined_call_operand.vmem [shape: bf16[3,16,64], index: 2, kind: input, shape index: {}]
  %s3 = inlined_call_operand.vmem [shape: f32[1,64], index: 3, kind: input, shape index: {}]
  %s4 = inlined_call_operand.hbm [shape: f32[32,64], index: 4, kind: output, shape index: {}]
  %s5 = sld [smem:[#allocation0]]
  $region49: #{tpu_custom_call.1} parent=0
    _
  %s7 = ssub.s32 1, %s5
  %s8 = scalar_select 0, %s7, %s5
  $region1: #{tpu_custom_call.1} parent=0
    #allocation3 [shape = 'u8[16384]{0}', space=vmem, size = 0x4000, scoped, tag = 'output window, operand 0']
    #allocation4 [shape = 's32[2]{0}', space=sflag, size = 0x8, scoped, tag = 'scoped memory for tpu_custom_call.1']
    %9 = vsyncpa [#allocation4], 0
    %s10 = scalar_lea.sflag [#allocation4], 1
    %11 = vsyncpa %s10, 0
    loop: start=0, step=1, limit=4
    $region2: #{tpu_custom_call.1} parent=1 // loop_pre_header
      _
    $region3: #{tpu_custom_call.1} parent=1 // loop_header
      %s13 = sphi 0, %s17
      %p14 = scmp.ge.s32.totalorder %s13, 4
      %s23 = sphi 0, %s25
      %s26 = sphi 0, %s23
      %s27 = sphi 0, %s26
      %s43 = sphi 0, %s27
      %s49 = sphi 0, %s51
      %s52 = sphi 0, %s49
      %s53 = sphi 0, %s52
      %s69 = sphi 0, %s53
      %s73 = sphi 0, %s73
      %s75 = sphi 0, %s73
      %s76 = sphi 0, %s75
      %s90 = sphi 0, %s76
      %s94 = sphi 0, %s94
      %s96 = sphi 0, %s94
      %s97 = sphi 0, %s96
      %s111 = sphi 0, %s97
      %s117 = sphi 0, %s119
      %s120 = sphi 0, %s117
      %s121 = sphi 0, %s120
      %s137 = sphi 0, %s121
    $region4: #{tpu_custom_call.1} parent=1 // loop_header_branch
      %16 = sbr.rel (%p14) target = $region8
    $region5: #{tpu_custom_call.1} parent=1 // loop_body
      %s18 = ssub.s32 %s13, 1
      %s19 = ssub.s32 %s13, 2
      %s20 = sadd.s32 %s13, 1
      %s21 = ssub.s32 %s13, %s20
      %p22 = scmp.eq.s32.totalorder %s21, 0
      %s24 = sadd.s32 %s23, 1
      %s25 = scalar_select %p22, %s23, %s24
      %p28 = pneg %p22
      %p29 = scmp.eq.s32.totalorder %s13, 1
      %p30 = por %p28, %p29
      %p31 = scmp.ne.s32.totalorder %s23, %s26
      %p32 = scmp.eq.s32.totalorder %s13, 0
      %p33 = por %p31, %p32
      %p34 = scmp.ne.s32.totalorder %s23, %s26
      %p35 = scmp.eq.s32.totalorder %s18, 1
      %p36 = por %p34, %p35
      %p37 = scmp.ne.s32.totalorder %s26, %s27
      %p38 = scmp.eq.s32.totalorder %s18, 0
      %p39 = por %p37, %p38
      %p40 = scmp.ne.s32.totalorder %s26, %s27
      %p41 = scmp.eq.s32.totalorder %s19, 1
      %p42 = por %p40, %p41
      %p44 = scmp.ne.s32.totalorder %s27, %s43
      %p45 = scmp.eq.s32.totalorder %s19, 0
      %p46 = por %p44, %p45
      %s47 = ssub.s32 %s13, %s20
      %p48 = scmp.eq.s32.totalorder %s47, 0
      %s50 = sadd.s32 %s49, 1
      %s51 = scalar_select %p48, %s49, %s50
      %p54 = pneg %p48
      %p55 = scmp.eq.s32.totalorder %s13, 1
      %p56 = por %p54, %p55
      %p57 = scmp.ne.s32.totalorder %s49, %s52
      %p58 = scmp.eq.s32.totalorder %s13, 0
      %p59 = por %p57, %p58
      %p60 = scmp.ne.s32.totalorder %s49, %s52
      %p61 = scmp.eq.s32.totalorder %s18, 1
      %p62 = por %p60, %p61
      %p63 = scmp.ne.s32.totalorder %s52, %s53
      %p64 = scmp.eq.s32.totalorder %s18, 0
      %p65 = por %p63, %p64
      %p66 = scmp.ne.s32.totalorder %s52, %s53
      %p67 = scmp.eq.s32.totalorder %s19, 1
      %p68 = por %p66, %p67
      %p70 = scmp.ne.s32.totalorder %s53, %s69
      %p71 = scmp.eq.s32.totalorder %s19, 0
      %p72 = por %p70, %p71
      %s74 = sadd.s32 %s73, 1
      %p77 = scmp.eq.s32.totalorder %s13, 1
      %p78 = scmp.ne.s32.totalorder %s73, %s75
      %p79 = scmp.eq.s32.totalorder %s13, 0
      %p80 = por %p78, %p79
      %p81 = scmp.ne.s32.totalorder %s73, %s75
      %p82 = scmp.eq.s32.totalorder %s18, 1
      %p83 = por %p81, %p82
      %p84 = scmp.ne.s32.totalorder %s75, %s76
      %p85 = scmp.eq.s32.totalorder %s18, 0
      %p86 = por %p84, %p85
      %p87 = scmp.ne.s32.totalorder %s75, %s76
      %p88 = scmp.eq.s32.totalorder %s19, 1
      %p89 = por %p87, %p88
      %p91 = scmp.ne.s32.totalorder %s76, %s90
      %p92 = scmp.eq.s32.totalorder %s19, 0
      %p93 = por %p91, %p92
      %s95 = sadd.s32 %s94, 1
      %p98 = scmp.eq.s32.totalorder %s13, 1
      %p99 = scmp.ne.s32.totalorder %s94, %s96
      %p100 = scmp.eq.s32.totalorder %s13, 0
      %p101 = por %p99, %p100
      %p102 = scmp.ne.s32.totalorder %s94, %s96
      %p103 = scmp.eq.s32.totalorder %s18, 1
      %p104 = por %p102, %p103
      %p105 = scmp.ne.s32.totalorder %s96, %s97
      %p106 = scmp.eq.s32.totalorder %s18, 0
      %p107 = por %p105, %p106
      %p108 = scmp.ne.s32.totalorder %s96, %s97
      %p109 = scmp.eq.s32.totalorder %s19, 1
      %p110 = por %p108, %p109
      %p112 = scmp.ne.s32.totalorder %s97, %s111
      %p113 = scmp.eq.s32.totalorder %s19, 0
      %p114 = por %p112, %p113
      %s115 = ssub.s32 %s13, %s20
      %p116 = scmp.eq.s32.totalorder %s115, 0
      %s118 = sadd.s32 %s117, 1
      %s119 = scalar_select %p116, %s117, %s118
      %p122 = pneg %p116
      %p123 = scmp.eq.s32.totalorder %s13, 1
      %p124 = por %p122, %p123
      %p125 = scmp.ne.s32.totalorder %s117, %s120
      %p126 = scmp.eq.s32.totalorder %s13, 0
      %p127 = por %p125, %p126
      %p128 = scmp.ne.s32.totalorder %s117, %s120
      %p129 = scmp.eq.s32.totalorder %s18, 1
      %p130 = por %p128, %p129
      %p131 = scmp.ne.s32.totalorder %s120, %s121
      %p132 = scmp.eq.s32.totalorder %s18, 0
      %p133 = por %p131, %p132
      %p134 = scmp.ne.s32.totalorder %s120, %s121
      %p135 = scmp.eq.s32.totalorder %s19, 1
      %p136 = por %p134, %p135
      %p138 = scmp.ne.s32.totalorder %s121, %s137
      %p139 = scmp.eq.s32.totalorder %s19, 0
      %p140 = por %p138, %p139
      %p141 = scmp.le.s32.totalorder 1, %s13
      %p142 = scmp.lt.s32.totalorder %s13, 3
      %p143 = pnand %p141, %p142
      %p144 = pneg %p143
      // Predicated region
      $region9: #{tpu_custom_call.1} parent=5 // pred_check
        _
      $region10: #{tpu_custom_call.1} parent=5 // pred_check_branch
        %146 = sbr.rel (%p143) target = $region12
      $region11: #{tpu_custom_call.1} parent=5 // pred_region
        %s147 = ssub.s32 %s13, 1
        // Predicated region
        $region13: #{tpu_custom_call.1} parent=11 // pred_check
          %p148 = pneg %p86
        $region14: #{tpu_custom_call.1} parent=11 // pred_check_branch
          %150 = sbr.rel (%p148) target = $region16
        $region15: #{tpu_custom_call.1} parent=11 // pred_region
          _
        $region16: #{tpu_custom_call.1} parent=11 // pred_fallthru
          _
        // Predicated region
        $region17: #{tpu_custom_call.1} parent=11 // pred_check
          %p151 = pneg %p107
        $region18: #{tpu_custom_call.1} parent=11 // pred_check_branch
          %153 = sbr.rel (%p151) target = $region20
        $region19: #{tpu_custom_call.1} parent=11 // pred_region
          _
        $region20: #{tpu_custom_call.1} parent=11 // pred_fallthru
          _
      $region12: #{tpu_custom_call.1} parent=5 // pred_fallthru
        _
      %p154 = scmp.lt.s32.totalorder %s13, 2
      // Predicated region
      $region21: #{tpu_custom_call.1} parent=5 // pred_check
        %p155 = pneg %p154
      $region22: #{tpu_custom_call.1} parent=5 // pred_check_branch
        %157 = sbr.rel (%p155) target = $region24
      $region23: #{tpu_custom_call.1} parent=5 // pred_region
        // Predicated region
        $region25: #{tpu_custom_call.1} parent=23 // pred_check
          %p158 = pneg %p33
        $region26: #{tpu_custom_call.1} parent=23 // pred_check_branch
          %160 = sbr.rel (%p158) target = $region28
        $region27: #{tpu_custom_call.1} parent=23 // pred_region
          %s161 = smul.u32 32, %s13
          %p162 = scmp.lt.s32.totalorder %s161, 63
          %s163 = scalar_select %p162, %s161, 63
          %s164 = smul.addr %s163, 8
          %s165 = scalar_lea.vmem %s0, %s164
          %s166 = smul.u32 32, %s13
        $region28: #{tpu_custom_call.1} parent=23 // pred_fallthru
          _
        // Predicated region
        $region29: #{tpu_custom_call.1} parent=23 // pred_check
          %p167 = pneg %p59
        $region30: #{tpu_custom_call.1} parent=23 // pred_check_branch
          %169 = sbr.rel (%p167) target = $region32
        $region31: #{tpu_custom_call.1} parent=23 // pred_region
          %s170 = smul.u32 32, %s13
          %p171 = scmp.lt.s32.totalorder %s170, 63
          %s172 = scalar_select %p171, %s170, 63
          %s173 = smul.addr %s172, 8
          %s174 = scalar_lea.vmem %s1, %s173
          %s175 = smul.u32 32, %s13
        $region32: #{tpu_custom_call.1} parent=23 // pred_fallthru
          _
      $region24: #{tpu_custom_call.1} parent=5 // pred_fallthru
        _
      %p176 = scmp.le.s32.totalorder 1, %s13
      %p177 = scmp.lt.s32.totalorder %s13, 3
      %p178 = pnand %p176, %p177
      %p179 = pneg %p178
      // Predicated region
      $region33: #{tpu_custom_call.1} parent=5 // pred_check
        _
      $region34: #{tpu_custom_call.1} parent=5 // pred_check_branch
        %181 = sbr.rel (%p178) target = $region36
      $region35: #{tpu_custom_call.1} parent=5 // pred_region
        %s182 = ssub.s32 %s13, 1
        %s183 = smul.u32 32, %s18
        %p184 = scmp.lt.s32.totalorder %s183, 63
        %s185 = scalar_select %p184, %s183, 63
        %s186 = smul.addr %s185, 8
        %s187 = scalar_lea.vmem %s0, %s186
        %p188 = pneg %p39
        %p189 = pneg %p36
        %s190 = smul.u32 32, %s18
        %p191 = scmp.lt.s32.totalorder %s190, 63
        %s192 = scalar_select %p191, %s190, 63
        %s193 = smul.addr %s192, 8
        %s194 = scalar_lea.vmem %s1, %s193
        %p195 = pneg %p65
        %p196 = pneg %p62
        %p197 = pneg %p86
        %p198 = pneg %p83
        %p199 = pneg %p107
        %p200 = pneg %p104
        %p201 = pneg %p133
        %p202 = pneg %p130
        %s203 = sand.u32 %s120, 1
        %s204 = scalar_lea.sflag [#allocation4], %s203
        %s205 = sand.u32 %s120, 1
        %s206 = smul.addr %s205, 16
        %s207 = scalar_lea.vmem [#allocation3], %s206
        %s208 = smul.u32 32, %s18
        %p209 = scmp.lt.s32.totalorder %s208, 63
        %s210 = scalar_select %p209, %s208, 63
        %s211 = smul.addr %s210, 8
        %s212 = scalar_lea.vmem %s0, %s211
        %s213 = smul.u32 32, %s18
        %s214 = smul.u32 32, %s18
        %p215 = scmp.lt.s32.totalorder %s214, 63
        %s216 = scalar_select %p215, %s214, 63
        %s217 = smul.addr %s216, 8
        %s218 = scalar_lea.vmem %s1, %s217
        %s219 = smul.u32 32, %s18
        %s220 = smul.u32 2, %s18
        %v222 = vld [vmem:[%s212] sm:$0xff]
        %v223 = vld [vmem:[%s212 + $0x8] sm:$0xff]
        %v224 = vld [vmem:[%s212 + $0x10] sm:$0xff]
        %v225 = vld [vmem:[%s212 + $0x18] sm:$0xff]
        %v226 = vld [vmem:[%s212 + $0x20] sm:$0xff]
        %v227 = vld [vmem:[%s212 + $0x28] sm:$0xff]
        %v228 = vld [vmem:[%s212 + $0x30] sm:$0xff]
        %v229 = vld [vmem:[%s212 + $0x38] sm:$0xff]
        %v230 = vld [vmem:[%s212 + $0x40] sm:$0xff]
        %v231 = vld [vmem:[%s212 + $0x48] sm:$0xff]
        %v232 = vld [vmem:[%s212 + $0x50] sm:$0xff]
        %v233 = vld [vmem:[%s212 + $0x58] sm:$0xff]
        %v234 = vld [vmem:[%s212 + $0x60] sm:$0xff]
        %v235 = vld [vmem:[%s212 + $0x68] sm:$0xff]
        %v236 = vld [vmem:[%s212 + $0x70] sm:$0xff]
        %v237 = vld [vmem:[%s212 + $0x78] sm:$0xff]
        %v238 = vld [vmem:[%s212 + $0x80] sm:$0xff]
        %v239 = vld [vmem:[%s212 + $0x88] sm:$0xff]
        %v240 = vld [vmem:[%s212 + $0x90] sm:$0xff]
        %v241 = vld [vmem:[%s212 + $0x98] sm:$0xff]
        %v242 = vld [vmem:[%s212 + $0xa0] sm:$0xff]
        %v243 = vld [vmem:[%s212 + $0xa8] sm:$0xff]
        %v244 = vld [vmem:[%s212 + $0xb0] sm:$0xff]
        %v245 = vld [vmem:[%s212 + $0xb8] sm:$0xff]
        %v246 = vld [vmem:[%s212 + $0xc0] sm:$0xff]
        %v247 = vld [vmem:[%s212 + $0xc8] sm:$0xff]
        %v248 = vld [vmem:[%s212 + $0xd0] sm:$0xff]
        %v249 = vld [vmem:[%s212 + $0xd8] sm:$0xff]
        %v250 = vld [vmem:[%s212 + $0xe0] sm:$0xff]
        %v251 = vld [vmem:[%s212 + $0xe8] sm:$0xff]
        %v252 = vld [vmem:[%s212 + $0xf0] sm:$0xff]
        %v253 = vld [vmem:[%s212 + $0xf8] sm:$0xff]
        %vm254 = vcmask 130048
        %255 = vst.msk [vmem:[#allocation2] sm:$0xff] %vm254, 0.0
        %256 = vst.msk [vmem:[#allocation2 + $0x108] sm:$0xff] %vm254, 0.0
        %257 = vst.msk [vmem:[#allocation2 + $0x8] sm:$0xff] %vm254, %v222
        %258 = vst.msk [vmem:[#allocation2 + $0x10] sm:$0xff] %vm254, %v223
        %259 = vst.msk [vmem:[#allocation2 + $0x18] sm:$0xff] %vm254, %v224
        %260 = vst.msk [vmem:[#allocation2 + $0x20] sm:$0xff] %vm254, %v225
        %261 = vst.msk [vmem:[#allocation2 + $0x28] sm:$0xff] %vm254, %v226
        %262 = vst.msk [vmem:[#allocation2 + $0x30] sm:$0xff] %vm254, %v227
        %263 = vst.msk [vmem:[#allocation2 + $0x38] sm:$0xff] %vm254, %v228
        %264 = vst.msk [vmem:[#allocation2 + $0x40] sm:$0xff] %vm254, %v229
        %265 = vst.msk [vmem:[#allocation2 + $0x48] sm:$0xff] %vm254, %v230
        %266 = vst.msk [vmem:[#allocation2 + $0x50] sm:$0xff] %vm254, %v231
        %267 = vst.msk [vmem:[#allocation2 + $0x58] sm:$0xff] %vm254, %v232
        %268 = vst.msk [vmem:[#allocation2 + $0x60] sm:$0xff] %vm254, %v233
        %269 = vst.msk [vmem:[#allocation2 + $0x68] sm:$0xff] %vm254, %v234
        %270 = vst.msk [vmem:[#allocation2 + $0x70] sm:$0xff] %vm254, %v235
        %271 = vst.msk [vmem:[#allocation2 + $0x78] sm:$0xff] %vm254, %v236
        %272 = vst.msk [vmem:[#allocation2 + $0x80] sm:$0xff] %vm254, %v237
        %273 = vst.msk [vmem:[#allocation2 + $0x88] sm:$0xff] %vm254, %v238
        %274 = vst.msk [vmem:[#allocation2 + $0x90] sm:$0xff] %vm254, %v239
        %275 = vst.msk [vmem:[#allocation2 + $0x98] sm:$0xff] %vm254, %v240
        %276 = vst.msk [vmem:[#allocation2 + $0xa0] sm:$0xff] %vm254, %v241
        %277 = vst.msk [vmem:[#allocation2 + $0xa8] sm:$0xff] %vm254, %v242
        %278 = vst.msk [vmem:[#allocation2 + $0xb0] sm:$0xff] %vm254, %v243
        %279 = vst.msk [vmem:[#allocation2 + $0xb8] sm:$0xff] %vm254, %v244
        %280 = vst.msk [vmem:[#allocation2 + $0xc0] sm:$0xff] %vm254, %v245
        %281 = vst.msk [vmem:[#allocation2 + $0xc8] sm:$0xff] %vm254, %v246
        %282 = vst.msk [vmem:[#allocation2 + $0xd0] sm:$0xff] %vm254, %v247
        %283 = vst.msk [vmem:[#allocation2 + $0xd8] sm:$0xff] %vm254, %v248
        %284 = vst.msk [vmem:[#allocation2 + $0xe0] sm:$0xff] %vm254, %v249
        %285 = vst.msk [vmem:[#allocation2 + $0xe8] sm:$0xff] %vm254, %v250
        %286 = vst.msk [vmem:[#allocation2 + $0xf0] sm:$0xff] %vm254, %v251
        %287 = vst.msk [vmem:[#allocation2 + $0xf8] sm:$0xff] %vm254, %v252
        %288 = vst.msk [vmem:[#allocation2 + $0x100] sm:$0xff] %vm254, %v253
        %v289 = vld [vmem:[#allocation2] sm:$0xff]
        %v290 = vld [vmem:[#allocation2 + $0x8] sm:$0xff]
        %v291 = vld [vmem:[#allocation2 + $0x10] sm:$0xff]
        %v292 = vld [vmem:[#allocation2 + $0x18] sm:$0xff]
        %v293 = vld [vmem:[#allocation2 + $0x20] sm:$0xff]
        %v294 = vld [vmem:[#allocation2 + $0x28] sm:$0xff]
        %v295 = vld [vmem:[#allocation2 + $0x30] sm:$0xff]
        %v296 = vld [vmem:[#allocation2 + $0x38] sm:$0xff]
        %v297 = vld [vmem:[#allocation2 + $0x40] sm:$0xff]
        %v298 = vld [vmem:[#allocation2 + $0x48] sm:$0xff]
        %v299 = vld [vmem:[#allocation2 + $0x50] sm:$0xff]
        %v300 = vld [vmem:[#allocation2 + $0x58] sm:$0xff]
        %v301 = vld [vmem:[#allocation2 + $0x60] sm:$0xff]
        %v302 = vld [vmem:[#allocation2 + $0x68] sm:$0xff]
        %v303 = vld [vmem:[#allocation2 + $0x70] sm:$0xff]
        %v304 = vld [vmem:[#allocation2 + $0x78] sm:$0xff]
        %v305 = vld [vmem:[#allocation2 + $0x80] sm:$0xff]
        %v306 = vld [vmem:[#allocation2 + $0x88] sm:$0xff]
        %v307 = vld [vmem:[#allocation2 + $0x90] sm:$0xff]
        %v308 = vld [vmem:[#allocation2 + $0x98] sm:$0xff]
        %v309 = vld [vmem:[#allocation2 + $0xa0] sm:$0xff]
        %v310 = vld [vmem:[#allocation2 + $0xa8] sm:$0xff]
        %v311 = vld [vmem:[#allocation2 + $0xb0] sm:$0xff]
        %v312 = vld [vmem:[#allocation2 + $0xb8] sm:$0xff]
        %v313 = vld [vmem:[#allocation2 + $0xc0] sm:$0xff]
        %v314 = vld [vmem:[#allocation2 + $0xc8] sm:$0xff]
        %v315 = vld [vmem:[#allocation2 + $0xd0] sm:$0xff]
        %v316 = vld [vmem:[#allocation2 + $0xd8] sm:$0xff]
        %v317 = vld [vmem:[#allocation2 + $0xe0] sm:$0xff]
        %v318 = vld [vmem:[#allocation2 + $0xe8] sm:$0xff]
        %v319 = vld [vmem:[#allocation2 + $0xf0] sm:$0xff]
        %v320 = vld [vmem:[#allocation2 + $0xf8] sm:$0xff]
        %v321 = vld [vmem:[#allocation2 + $0x100] sm:$0xff]
        %v322 = vld [vmem:[#allocation2 + $0x108] sm:$0xff]
        %v323 = vlaneseq
        %v324 = vshrl.u32 %v323, 7
        %v325 = vadd.s32 %v324, 8
        %v326 = vadd.s32 %v324, 16
        %v327 = vadd.s32 %v324, 24
        %v328 = vadd.s32 %v324, 32
        %v329 = vadd.s32 %v324, 40
        %v330 = vadd.s32 %v324, 48
        %v331 = vadd.s32 %v324, 56
        %v332 = vadd.s32 %v324, 64
        %v333 = vadd.s32 %v324, 72
        %v334 = vadd.s32 %v324, 80
        %v335 = vadd.s32 %v324, 88
        %v336 = vadd.s32 %v324, 96
        %v337 = vadd.s32 %v324, 104
        %v338 = vadd.s32 %v324, 112
        %v339 = vadd.s32 %v324, 120
        %v340 = vadd.s32 %v324, 128
        %v341 = vadd.s32 %v324, 136
        %v342 = vadd.s32 %v324, 144
        %v343 = vadd.s32 %v324, 152
        %v344 = vadd.s32 %v324, 160
        %v345 = vadd.s32 %v324, 168
        %v346 = vadd.s32 %v324, 176
        %v347 = vadd.s32 %v324, 184
        %v348 = vadd.s32 %v324, 192
        %v349 = vadd.s32 %v324, 200
        %v350 = vadd.s32 %v324, 208
        %v351 = vadd.s32 %v324, 216
        %v352 = vadd.s32 %v324, 224
        %v353 = vadd.s32 %v324, 232
        %v354 = vadd.s32 %v324, 240
        %v355 = vadd.s32 %v324, 248
        %vm356 = vcmp.lt.s32.totalorder %v324, 0
        %v357 = vsub.s32 0, %v324
        %v358 = vsel %vm356, %v357, %v324
        %v359 = vshrl.u32 %v358, 4
        %v360 = vand.u32 %v358, 15
        %v361 = vsub.s32 0, %v360
        %v362 = vsel %vm356, %v361, %v360
        %vm363 = vcmp.lt.s32.totalorder %v325, 0
        %v364 = vsub.s32 0, %v325
        %v365 = vsel %vm363, %v364, %v325
        %v366 = vshrl.u32 %v365, 4
        %v367 = vand.u32 %v365, 15
        %v368 = vsub.s32 0, %v367
        %v369 = vsel %vm363, %v368, %v367
        %vm370 = vcmp.lt.s32.totalorder %v326, 0
        %v371 = vsub.s32 0, %v326
        %v372 = vsel %vm370, %v371, %v326
        %v373 = vshrl.u32 %v372, 4
        %v374 = vand.u32 %v372, 15
        %v375 = vsub.s32 0, %v374
        %v376 = vsel %vm370, %v375, %v374
        %vm377 = vcmp.lt.s32.totalorder %v327, 0
        %v378 = vsub.s32 0, %v327
        %v379 = vsel %vm377, %v378, %v327
        %v380 = vshrl.u32 %v379, 4
        %v381 = vand.u32 %v379, 15
        %v382 = vsub.s32 0, %v381
        %v383 = vsel %vm377, %v382, %v381
        %vm384 = vcmp.lt.s32.totalorder %v328, 0
        %v385 = vsub.s32 0, %v328
        %v386 = vsel %vm384, %v385, %v328
        %v387 = vshrl.u32 %v386, 4
        %v388 = vand.u32 %v386, 15
        %v389 = vsub.s32 0, %v388
        %v390 = vsel %vm384, %v389, %v388
        %vm391 = vcmp.lt.s32.totalorder %v329, 0
        %v392 = vsub.s32 0, %v329
        %v393 = vsel %vm391, %v392, %v329
        %v394 = vshrl.u32 %v393, 4
        %v395 = vand.u32 %v393, 15
        %v396 = vsub.s32 0, %v395
        %v397 = vsel %vm391, %v396, %v395
        %vm398 = vcmp.lt.s32.totalorder %v330, 0
        %v399 = vsub.s32 0, %v330
        %v400 = vsel %vm398, %v399, %v330
        %v401 = vshrl.u32 %v400, 4
        %v402 = vand.u32 %v400, 15
        %v403 = vsub.s32 0, %v402
        %v404 = vsel %vm398, %v403, %v402
        %vm405 = vcmp.lt.s32.totalorder %v331, 0
        %v406 = vsub.s32 0, %v331
        %v407 = vsel %vm405, %v406, %v331
        %v408 = vshrl.u32 %v407, 4
        %v409 = vand.u32 %v407, 15
        %v410 = vsub.s32 0, %v409
        %v411 = vsel %vm405, %v410, %v409
        %vm412 = vcmp.lt.s32.totalorder %v332, 0
        %v413 = vsub.s32 0, %v332
        %v414 = vsel %vm412, %v413, %v332
        %v415 = vshrl.u32 %v414, 4
        %v416 = vand.u32 %v414, 15
        %v417 = vsub.s32 0, %v416
        %v418 = vsel %vm412, %v417, %v416
        %vm419 = vcmp.lt.s32.totalorder %v333, 0
        %v420 = vsub.s32 0, %v333
        %v421 = vsel %vm419, %v420, %v333
        %v422 = vshrl.u32 %v421, 4
        %v423 = vand.u32 %v421, 15
        %v424 = vsub.s32 0, %v423
        %v425 = vsel %vm419, %v424, %v423
        %vm426 = vcmp.lt.s32.totalorder %v334, 0
        %v427 = vsub.s32 0, %v334
        %v428 = vsel %vm426, %v427, %v334
        %v429 = vshrl.u32 %v428, 4
        %v430 = vand.u32 %v428, 15
        %v431 = vsub.s32 0, %v430
        %v432 = vsel %vm426, %v431, %v430
        %vm433 = vcmp.lt.s32.totalorder %v335, 0
        %v434 = vsub.s32 0, %v335
        %v435 = vsel %vm433, %v434, %v335
        %v436 = vshrl.u32 %v435, 4
        %v437 = vand.u32 %v435, 15
        %v438 = vsub.s32 0, %v437
        %v439 = vsel %vm433, %v438, %v437
        %vm440 = vcmp.lt.s32.totalorder %v336, 0
        %v441 = vsub.s32 0, %v336
        %v442 = vsel %vm440, %v441, %v336
        %v443 = vshrl.u32 %v442, 4
        %v444 = vand.u32 %v442, 15
        %v445 = vsub.s32 0, %v444
        %v446 = vsel %vm440, %v445, %v444
        %vm447 = vcmp.lt.s32.totalorder %v337, 0
        %v448 = vsub.s32 0, %v337
        %v449 = vsel %vm447, %v448, %v337
        %v450 = vshrl.u32 %v449, 4
        %v451 = vand.u32 %v449, 15
        %v452 = vsub.s32 0, %v451
        %v453 = vsel %vm447, %v452, %v451
        %vm454 = vcmp.lt.s32.totalorder %v338, 0
        %v455 = vsub.s32 0, %v338
        %v456 = vsel %vm454, %v455, %v338
        %v457 = vshrl.u32 %v456, 4
        %v458 = vand.u32 %v456, 15
        %v459 = vsub.s32 0, %v458
        %v460 = vsel %vm454, %v459, %v458
        %vm461 = vcmp.lt.s32.totalorder %v339, 0
        %v462 = vsub.s32 0, %v339
        %v463 = vsel %vm461, %v462, %v339
        %v464 = vshrl.u32 %v463, 4
        %v465 = vand.u32 %v463, 15
        %v466 = vsub.s32 0, %v465
        %v467 = vsel %vm461, %v466, %v465
        %vm468 = vcmp.lt.s32.totalorder %v340, 0
        %v469 = vsub.s32 0, %v340
        %v470 = vsel %vm468, %v469, %v340
        %v471 = vshrl.u32 %v470, 4
        %v472 = vand.u32 %v470, 15
        %v473 = vsub.s32 0, %v472
        %v474 = vsel %vm468, %v473, %v472
        %vm475 = vcmp.lt.s32.totalorder %v341, 0
        %v476 = vsub.s32 0, %v341
        %v477 = vsel %vm475, %v476, %v341
        %v478 = vshrl.u32 %v477, 4
        %v479 = vand.u32 %v477, 15
        %v480 = vsub.s32 0, %v479
        %v481 = vsel %vm475, %v480, %v479
        %vm482 = vcmp.lt.s32.totalorder %v342, 0
        %v483 = vsub.s32 0, %v342
        %v484 = vsel %vm482, %v483, %v342
        %v485 = vshrl.u32 %v484, 4
        %v486 = vand.u32 %v484, 15
        %v487 = vsub.s32 0, %v486
        %v488 = vsel %vm482, %v487, %v486
        %vm489 = vcmp.lt.s32.totalorder %v343, 0
        %v490 = vsub.s32 0, %v343
        %v491 = vsel %vm489, %v490, %v343
        %v492 = vshrl.u32 %v491, 4
        %v493 = vand.u32 %v491, 15
        %v494 = vsub.s32 0, %v493
        %v495 = vsel %vm489, %v494, %v493
        %vm496 = vcmp.lt.s32.totalorder %v344, 0
        %v497 = vsub.s32 0, %v344
        %v498 = vsel %vm496, %v497, %v344
        %v499 = vshrl.u32 %v498, 4
        %v500 = vand.u32 %v498, 15
        %v501 = vsub.s32 0, %v500
        %v502 = vsel %vm496, %v501, %v500
        %vm503 = vcmp.lt.s32.totalorder %v345, 0
        %v504 = vsub.s32 0, %v345
        %v505 = vsel %vm503, %v504, %v345
        %v506 = vshrl.u32 %v505, 4
        %v507 = vand.u32 %v505, 15
        %v508 = vsub.s32 0, %v507
        %v509 = vsel %vm503, %v508, %v507
        %vm510 = vcmp.lt.s32.totalorder %v346, 0
        %v511 = vsub.s32 0, %v346
        %v512 = vsel %vm510, %v511, %v346
        %v513 = vshrl.u32 %v512, 4
        %v514 = vand.u32 %v512, 15
        %v515 = vsub.s32 0, %v514
        %v516 = vsel %vm510, %v515, %v514
        %vm517 = vcmp.lt.s32.totalorder %v347, 0
        %v518 = vsub.s32 0, %v347
        %v519 = vsel %vm517, %v518, %v347
        %v520 = vshrl.u32 %v519, 4
        %v521 = vand.u32 %v519, 15
        %v522 = vsub.s32 0, %v521
        %v523 = vsel %vm517, %v522, %v521
        %vm524 = vcmp.lt.s32.totalorder %v348, 0
        %v525 = vsub.s32 0, %v348
        %v526 = vsel %vm524, %v525, %v348
        %v527 = vshrl.u32 %v526, 4
        %v528 = vand.u32 %v526, 15
        %v529 = vsub.s32 0, %v528
        %v530 = vsel %vm524, %v529, %v528
        %vm531 = vcmp.lt.s32.totalorder %v349, 0
        %v532 = vsub.s32 0, %v349
        %v533 = vsel %vm531, %v532, %v349
        %v534 = vshrl.u32 %v533, 4
        %v535 = vand.u32 %v533, 15
        %v536 = vsub.s32 0, %v535
        %v537 = vsel %vm531, %v536, %v535
        %vm538 = vcmp.lt.s32.totalorder %v350, 0
        %v539 = vsub.s32 0, %v350
        %v540 = vsel %vm538, %v539, %v350
        %v541 = vshrl.u32 %v540, 4
        %v542 = vand.u32 %v540, 15
        %v543 = vsub.s32 0, %v542
        %v544 = vsel %vm538, %v543, %v542
        %vm545 = vcmp.lt.s32.totalorder %v351, 0
        %v546 = vsub.s32 0, %v351
        %v547 = vsel %vm545, %v546, %v351
        %v548 = vshrl.u32 %v547, 4
        %v549 = vand.u32 %v547, 15
        %v550 = vsub.s32 0, %v549
        %v551 = vsel %vm545, %v550, %v549
        %vm552 = vcmp.lt.s32.totalorder %v352, 0
        %v553 = vsub.s32 0, %v352
        %v554 = vsel %vm552, %v553, %v352
        %v555 = vshrl.u32 %v554, 4
        %v556 = vand.u32 %v554, 15
        %v557 = vsub.s32 0, %v556
        %v558 = vsel %vm552, %v557, %v556
        %vm559 = vcmp.lt.s32.totalorder %v353, 0
        %v560 = vsub.s32 0, %v353
        %v561 = vsel %vm559, %v560, %v353
        %v562 = vshrl.u32 %v561, 4
        %v563 = vand.u32 %v561, 15
        %v564 = vsub.s32 0, %v563
        %v565 = vsel %vm559, %v564, %v563
        %vm566 = vcmp.lt.s32.totalorder %v354, 0
        %v567 = vsub.s32 0, %v354
        %v568 = vsel %vm566, %v567, %v354
        %v569 = vshrl.u32 %v568, 4
        %v570 = vand.u32 %v568, 15
        %v571 = vsub.s32 0, %v570
        %v572 = vsel %vm566, %v571, %v570
        %vm573 = vcmp.lt.s32.totalorder %v355, 0
        %v574 = vsub.s32 0, %v355
        %v575 = vsel %vm573, %v574, %v355
        %v576 = vshrl.u32 %v575, 4
        %v577 = vand.u32 %v575, 15
        %v578 = vsub.s32 0, %v577
        %v579 = vsel %vm573, %v578, %v577
        %vm580 = vcmp.ne.s32.totalorder %v362, 0
        %vm581 = vcmp.ne.s32.totalorder %v369, 0
        %vm582 = vcmp.ne.s32.totalorder %v376, 0
        %vm583 = vcmp.ne.s32.totalorder %v383, 0
        %vm584 = vcmp.ne.s32.totalorder %v390, 0
        %vm585 = vcmp.ne.s32.totalorder %v397, 0
        %vm586 = vcmp.ne.s32.totalorder %v404, 0
        %vm587 = vcmp.ne.s32.totalorder %v411, 0
        %vm588 = vcmp.ne.s32.totalorder %v418, 0
        %vm589 = vcmp.ne.s32.totalorder %v425, 0
        %vm590 = vcmp.ne.s32.totalorder %v432, 0
        %vm591 = vcmp.ne.s32.totalorder %v439, 0
        %vm592 = vcmp.ne.s32.totalorder %v446, 0
        %vm593 = vcmp.ne.s32.totalorder %v453, 0
        %vm594 = vcmp.ne.s32.totalorder %v460, 0
        %vm595 = vcmp.ne.s32.totalorder %v467, 0
        %vm596 = vcmp.ne.s32.totalorder %v474, 0
        %vm597 = vcmp.ne.s32.totalorder %v481, 0
        %vm598 = vcmp.ne.s32.totalorder %v488, 0
        %vm599 = vcmp.ne.s32.totalorder %v495, 0
        %vm600 = vcmp.ne.s32.totalorder %v502, 0
        %vm601 = vcmp.ne.s32.totalorder %v509, 0
        %vm602 = vcmp.ne.s32.totalorder %v516, 0
        %vm603 = vcmp.ne.s32.totalorder %v523, 0
        %vm604 = vcmp.ne.s32.totalorder %v530, 0
        %vm605 = vcmp.ne.s32.totalorder %v537, 0
        %vm606 = vcmp.ne.s32.totalorder %v544, 0
        %vm607 = vcmp.ne.s32.totalorder %v551, 0
        %vm608 = vcmp.ne.s32.totalorder %v558, 0
        %vm609 = vcmp.ne.s32.totalorder %v565, 0
        %vm610 = vcmp.ne.s32.totalorder %v572, 0
        %vm611 = vcmp.ne.s32.totalorder %v579, 0
        %vm612 = vcmp.lt.s32.totalorder %v362, 0
        %vm613 = vcmp.lt.s32.totalorder %v369, 0
        %vm614 = vcmp.lt.s32.totalorder %v376, 0
        %vm615 = vcmp.lt.s32.totalorder %v383, 0
        %vm616 = vcmp.lt.s32.totalorder %v390, 0
        %vm617 = vcmp.lt.s32.totalorder %v397, 0
        %vm618 = vcmp.lt.s32.totalorder %v404, 0
        %vm619 = vcmp.lt.s32.totalorder %v411, 0
        %vm620 = vcmp.lt.s32.totalorder %v418, 0
        %vm621 = vcmp.lt.s32.totalorder %v425, 0
        %vm622 = vcmp.lt.s32.totalorder %v432, 0
        %vm623 = vcmp.lt.s32.totalorder %v439, 0
        %vm624 = vcmp.lt.s32.totalorder %v446, 0
        %vm625 = vcmp.lt.s32.totalorder %v453, 0
        %vm626 = vcmp.lt.s32.totalorder %v460, 0
        %vm627 = vcmp.lt.s32.totalorder %v467, 0
        %vm628 = vcmp.lt.s32.totalorder %v474, 0
        %vm629 = vcmp.lt.s32.totalorder %v481, 0
        %vm630 = vcmp.lt.s32.totalorder %v488, 0
        %vm631 = vcmp.lt.s32.totalorder %v495, 0
        %vm632 = vcmp.lt.s32.totalorder %v502, 0
        %vm633 = vcmp.lt.s32.totalorder %v509, 0
        %vm634 = vcmp.lt.s32.totalorder %v516, 0
        %vm635 = vcmp.lt.s32.totalorder %v523, 0
        %vm636 = vcmp.lt.s32.totalorder %v530, 0
        %vm637 = vcmp.lt.s32.totalorder %v537, 0
        %vm638 = vcmp.lt.s32.totalorder %v544, 0
        %vm639 = vcmp.lt.s32.totalorder %v551, 0
        %vm640 = vcmp.lt.s32.totalorder %v558, 0
        %vm641 = vcmp.lt.s32.totalorder %v565, 0
        %vm642 = vcmp.lt.s32.totalorder %v572, 0
        %vm643 = vcmp.lt.s32.totalorder %v579, 0
        %vm644 = vmand %vm612, %vm580
        %vm645 = vmand %vm613, %vm581
        %vm646 = vmand %vm614, %vm582
        %vm647 = vmand %vm615, %vm583
        %vm648 = vmand %vm616, %vm584
        %vm649 = vmand %vm617, %vm585
        %vm650 = vmand %vm618, %vm586
        %vm651 = vmand %vm619, %vm587
        %vm652 = vmand %vm620, %vm588
        %vm653 = vmand %vm621, %vm589
        %vm654 = vmand %vm622, %vm590
        %vm655 = vmand %vm623, %vm591
        %vm656 = vmand %vm624, %vm592
        %vm657 = vmand %vm625, %vm593
        %vm658 = vmand %vm626, %vm594
        %vm659 = vmand %vm627, %vm595
        %vm660 = vmand %vm628, %vm596
        %vm661 = vmand %vm629, %vm597
        %vm662 = vmand %vm630, %vm598
        %vm663 = vmand %vm631, %vm599
        %vm664 = vmand %vm632, %vm600
        %vm665 = vmand %vm633, %vm601
        %vm666 = vmand %vm634, %vm602
        %vm667 = vmand %vm635, %vm603
        %vm668 = vmand %vm636, %vm604
        %vm669 = vmand %vm637, %vm605
        %vm670 = vmand %vm638, %vm606
        %vm671 = vmand %vm639, %vm607
        %vm672 = vmand %vm640, %vm608
        %vm673 = vmand %vm641, %vm609
        %vm674 = vmand %vm642, %vm610
        %vm675 = vmand %vm643, %vm611
        %v676 = vadd.s32 %v362, 16
        %v677 = vadd.s32 %v369, 16
        %v678 = vadd.s32 %v376, 16
        %v679 = vadd.s32 %v383, 16
        %v680 = vadd.s32 %v390, 16
        %v681 = vadd.s32 %v397, 16
        %v682 = vadd.s32 %v404, 16
        %v683 = vadd.s32 %v411, 16
        %v684 = vadd.s32 %v418, 16
        %v685 = vadd.s32 %v425, 16
        %v686 = vadd.s32 %v432, 16
        %v687 = vadd.s32 %v439, 16
        %v688 = vadd.s32 %v446, 16
        %v689 = vadd.s32 %v453, 16
        %v690 = vadd.s32 %v460, 16
        %v691 = vadd.s32 %v467, 16
        %v692 = vadd.s32 %v474, 16
        %v693 = vadd.s32 %v481, 16
        %v694 = vadd.s32 %v488, 16
        %v695 = vadd.s32 %v495, 16
        %v696 = vadd.s32 %v502, 16
        %v697 = vadd.s32 %v509, 16
        %v698 = vadd.s32 %v516, 16
        %v699 = vadd.s32 %v523, 16
        %v700 = vadd.s32 %v530, 16
        %v701 = vadd.s32 %v537, 16
        %v702 = vadd.s32 %v544, 16
        %v703 = vadd.s32 %v551, 16
        %v704 = vadd.s32 %v558, 16
        %v705 = vadd.s32 %v565, 16
        %v706 = vadd.s32 %v572, 16
        %v707 = vadd.s32 %v579, 16
        %v708 = vsel %vm644, %v676, %v362
        %v709 = vsel %vm645, %v677, %v369
        %v710 = vsel %vm646, %v678, %v376
        %v711 = vsel %vm647, %v679, %v383
        %v712 = vsel %vm648, %v680, %v390
        %v713 = vsel %vm649, %v681, %v397
        %v714 = vsel %vm650, %v682, %v404
        %v715 = vsel %vm651, %v683, %v411
        %v716 = vsel %vm652, %v684, %v418
        %v717 = vsel %vm653, %v685, %v425
        %v718 = vsel %vm654, %v686, %v432
        %v719 = vsel %vm655, %v687, %v439
        %v720 = vsel %vm656, %v688, %v446
        %v721 = vsel %vm657, %v689, %v453
        %v722 = vsel %vm658, %v690, %v460
        %v723 = vsel %vm659, %v691, %v467
        %v724 = vsel %vm660, %v692, %v474
        %v725 = vsel %vm661, %v693, %v481
        %v726 = vsel %vm662, %v694, %v488
        %v727 = vsel %vm663, %v695, %v495
        %v728 = vsel %vm664, %v696, %v502
        %v729 = vsel %vm665, %v697, %v509
        %v730 = vsel %vm666, %v698, %v516
        %v731 = vsel %vm667, %v699, %v523
        %v732 = vsel %vm668, %v700, %v530
        %v733 = vsel %vm669, %v701, %v537
        %v734 = vsel %vm670, %v702, %v544
        %v735 = vsel %vm671, %v703, %v551
        %v736 = vsel %vm672, %v704, %v558
        %v737 = vsel %vm673, %v705, %v565
        %v738 = vsel %vm674, %v706, %v572
        %v739 = vsel %vm675, %v707, %v579
        %vm740 = vcmp.eq.s32.totalorder %v708, 0
        %vm741 = vcmp.eq.s32.totalorder %v709, 0
        %vm742 = vcmp.eq.s32.totalorder %v710, 0
        %vm743 = vcmp.eq.s32.totalorder %v711, 0
        %vm744 = vcmp.eq.s32.totalorder %v712, 0
        %vm745 = vcmp.eq.s32.totalorder %v713, 0
        %vm746 = vcmp.eq.s32.totalorder %v714, 0
        %vm747 = vcmp.eq.s32.totalorder %v715, 0
        %vm748 = vcmp.eq.s32.totalorder %v716, 0
        %vm749 = vcmp.eq.s32.totalorder %v717, 0
        %vm750 = vcmp.eq.s32.totalorder %v718, 0
        %vm751 = vcmp.eq.s32.totalorder %v719, 0
        %vm752 = vcmp.eq.s32.totalorder %v720, 0
        %vm753 = vcmp.eq.s32.totalorder %v721, 0
        %vm754 = vcmp.eq.s32.totalorder %v722, 0
        %vm755 = vcmp.eq.s32.totalorder %v723, 0
        %vm756 = vcmp.eq.s32.totalorder %v724, 0
        %vm757 = vcmp.eq.s32.totalorder %v725, 0
        %vm758 = vcmp.eq.s32.totalorder %v726, 0
        %vm759 = vcmp.eq.s32.totalorder %v727, 0
        %vm760 = vcmp.eq.s32.totalorder %v728, 0
        %vm761 = vcmp.eq.s32.totalorder %v729, 0
        %vm762 = vcmp.eq.s32.totalorder %v730, 0
        %vm763 = vcmp.eq.s32.totalorder %v731, 0
        %vm764 = vcmp.eq.s32.totalorder %v732, 0
        %vm765 = vcmp.eq.s32.totalorder %v733, 0
        %vm766 = vcmp.eq.s32.totalorder %v734, 0
        %vm767 = vcmp.eq.s32.totalorder %v735, 0
        %vm768 = vcmp.eq.s32.totalorder %v736, 0
        %vm769 = vcmp.eq.s32.totalorder %v737, 0
        %vm770 = vcmp.eq.s32.totalorder %v738, 0
        %vm771 = vcmp.eq.s32.totalorder %v739, 0
        %v772 = vsel %vm740, 1, 0
        %v773 = vsel %vm741, 1, 0
        %v774 = vsel %vm742, 1, 0
        %v775 = vsel %vm743, 1, 0
        %v776 = vsel %vm744, 1, 0
        %v777 = vsel %vm745, 1, 0
        %v778 = vsel %vm746, 1, 0
        %v779 = vsel %vm747, 1, 0
        %v780 = vsel %vm748, 1, 0
        %v781 = vsel %vm749, 1, 0
        %v782 = vsel %vm750, 1, 0
        %v783 = vsel %vm751, 1, 0
        %v784 = vsel %vm752, 1, 0
        %v785 = vsel %vm753, 1, 0
        %v786 = vsel %vm754, 1, 0
        %v787 = vsel %vm755, 1, 0
        %v788 = vsel %vm756, 1, 0
        %v789 = vsel %vm757, 1, 0
        %v790 = vsel %vm758, 1, 0
        %v791 = vsel %vm759, 1, 0
        %v792 = vsel %vm760, 1, 0
        %v793 = vsel %vm761, 1, 0
        %v794 = vsel %vm762, 1, 0
        %v795 = vsel %vm763, 1, 0
        %v796 = vsel %vm764, 1, 0
        %v797 = vsel %vm765, 1, 0
        %v798 = vsel %vm766, 1, 0
        %v799 = vsel %vm767, 1, 0
        %v800 = vsel %vm768, 1, 0
        %v801 = vsel %vm769, 1, 0
        %v802 = vsel %vm770, 1, 0
        %v803 = vsel %vm771, 1, 0
        %vm804 = vcmp.eq.s32.totalorder %v772, 1
        %vm805 = vcmp.eq.s32.totalorder %v773, 1
        %vm806 = vcmp.eq.s32.totalorder %v774, 1
        %vm807 = vcmp.eq.s32.totalorder %v775, 1
        %vm808 = vcmp.eq.s32.totalorder %v776, 1
        %vm809 = vcmp.eq.s32.totalorder %v777, 1
        %vm810 = vcmp.eq.s32.totalorder %v778, 1
        %vm811 = vcmp.eq.s32.totalorder %v779, 1
        %vm812 = vcmp.eq.s32.totalorder %v780, 1
        %vm813 = vcmp.eq.s32.totalorder %v781, 1
        %vm814 = vcmp.eq.s32.totalorder %v782, 1
        %vm815 = vcmp.eq.s32.totalorder %v783, 1
        %vm816 = vcmp.eq.s32.totalorder %v784, 1
        %vm817 = vcmp.eq.s32.totalorder %v785, 1
        %vm818 = vcmp.eq.s32.totalorder %v786, 1
        %vm819 = vcmp.eq.s32.totalorder %v787, 1
        %vm820 = vcmp.eq.s32.totalorder %v788, 1
        %vm821 = vcmp.eq.s32.totalorder %v789, 1
        %vm822 = vcmp.eq.s32.totalorder %v790, 1
        %vm823 = vcmp.eq.s32.totalorder %v791, 1
        %vm824 = vcmp.eq.s32.totalorder %v792, 1
        %vm825 = vcmp.eq.s32.totalorder %v793, 1
        %vm826 = vcmp.eq.s32.totalorder %v794, 1
        %vm827 = vcmp.eq.s32.totalorder %v795, 1
        %vm828 = vcmp.eq.s32.totalorder %v796, 1
        %vm829 = vcmp.eq.s32.totalorder %v797, 1
        %vm830 = vcmp.eq.s32.totalorder %v798, 1
        %vm831 = vcmp.eq.s32.totalorder %v799, 1
        %vm832 = vcmp.eq.s32.totalorder %v800, 1
        %vm833 = vcmp.eq.s32.totalorder %v801, 1
        %vm834 = vcmp.eq.s32.totalorder %v802, 1
        %vm835 = vcmp.eq.s32.totalorder %v803, 1
        %vm869 = vcmask 1040384
        %v870 = vrot.slane %v289, 7
        %v871 = vrot.slane %v290, 7
        %v872 = vsel %vm869, %v870, %v871
        %v873 = vrot.slane %v291, 7
        %v874 = vsel %vm869, %v871, %v873
        %v875 = vrot.slane %v292, 7
        %v876 = vsel %vm869, %v873, %v875
        %v877 = vrot.slane %v293, 7
        %v878 = vsel %vm869, %v875, %v877
        %v879 = vrot.slane %v294, 7
        %v880 = vsel %vm869, %v877, %v879
        %v881 = vrot.slane %v295, 7
        %v882 = vsel %vm869, %v879, %v881
        %v883 = vrot.slane %v296, 7
        %v884 = vsel %vm869, %v881, %v883
        %v885 = vrot.slane %v297, 7
        %v886 = vsel %vm869, %v883, %v885
        %v887 = vrot.slane %v298, 7
        %v888 = vsel %vm869, %v885, %v887
        %v889 = vrot.slane %v299, 7
        %v890 = vsel %vm869, %v887, %v889
        %v891 = vrot.slane %v300, 7
        %v892 = vsel %vm869, %v889, %v891
        %v893 = vrot.slane %v301, 7
        %v894 = vsel %vm869, %v891, %v893
        %v895 = vrot.slane %v302, 7
        %v896 = vsel %vm869, %v893, %v895
        %v897 = vrot.slane %v303, 7
        %v898 = vsel %vm869, %v895, %v897
        %v899 = vrot.slane %v304, 7
        %v900 = vsel %vm869, %v897, %v899
        %v901 = vrot.slane %v305, 7
        %v902 = vsel %vm869, %v899, %v901
        %v903 = vrot.slane %v306, 7
        %v904 = vsel %vm869, %v901, %v903
        %v905 = vrot.slane %v307, 7
        %v906 = vsel %vm869, %v903, %v905
        %v907 = vrot.slane %v308, 7
        %v908 = vsel %vm869, %v905, %v907
        %v909 = vrot.slane %v309, 7
        %v910 = vsel %vm869, %v907, %v909
        %v911 = vrot.slane %v310, 7
        %v912 = vsel %vm869, %v909, %v911
        %v913 = vrot.slane %v311, 7
        %v914 = vsel %vm869, %v911, %v913
        %v915 = vrot.slane %v312, 7
        %v916 = vsel %vm869, %v913, %v915
        %v917 = vrot.slane %v313, 7
        %v918 = vsel %vm869, %v915, %v917
        %v919 = vrot.slane %v314, 7
        %v920 = vsel %vm869, %v917, %v919
        %v921 = vrot.slane %v315, 7
        %v922 = vsel %vm869, %v919, %v921
        %v923 = vrot.slane %v316, 7
        %v924 = vsel %vm869, %v921, %v923
        %v925 = vrot.slane %v317, 7
        %v926 = vsel %vm869, %v923, %v925
        %v927 = vrot.slane %v318, 7
        %v928 = vsel %vm869, %v925, %v927
        %v929 = vrot.slane %v319, 7
        %v930 = vsel %vm869, %v927, %v929
        %v931 = vrot.slane %v320, 7
        %v932 = vsel %vm869, %v929, %v931
        %v933 = vrot.slane %v321, 7
        %v934 = vsel %vm869, %v931, %v933
        %v967 = vsel %vm804, 0.0, %v872
        %v968 = vsel %vm805, 0.0, %v874
        %v969 = vsel %vm806, 0.0, %v876
        %v970 = vsel %vm807, 0.0, %v878
        %v971 = vsel %vm808, 0.0, %v880
        %v972 = vsel %vm809, 0.0, %v882
        %v973 = vsel %vm810, 0.0, %v884
        %v974 = vsel %vm811, 0.0, %v886
        %v975 = vsel %vm812, 0.0, %v888
        %v976 = vsel %vm813, 0.0, %v890
        %v977 = vsel %vm814, 0.0, %v892
        %v978 = vsel %vm815, 0.0, %v894
        %v979 = vsel %vm816, 0.0, %v896
        %v980 = vsel %vm817, 0.0, %v898
        %v981 = vsel %vm818, 0.0, %v900
        %v982 = vsel %vm819, 0.0, %v902
        %v983 = vsel %vm820, 0.0, %v904
        %v984 = vsel %vm821, 0.0, %v906
        %v985 = vsel %vm822, 0.0, %v908
        %v986 = vsel %vm823, 0.0, %v910
        %v987 = vsel %vm824, 0.0, %v912
        %v988 = vsel %vm825, 0.0, %v914
        %v989 = vsel %vm826, 0.0, %v916
        %v990 = vsel %vm827, 0.0, %v918
        %v991 = vsel %vm828, 0.0, %v920
        %v992 = vsel %vm829, 0.0, %v922
        %v993 = vsel %vm830, 0.0, %v924
        %v994 = vsel %vm831, 0.0, %v926
        %v995 = vsel %vm832, 0.0, %v928
        %v996 = vsel %vm833, 0.0, %v930
        %v997 = vsel %vm834, 0.0, %v932
        %v998 = vsel %vm835, 0.0, %v934
        %vm999 = vcmp.eq.s32.totalorder %v708, 15
        %vm1000 = vcmp.eq.s32.totalorder %v709, 15
        %vm1001 = vcmp.eq.s32.totalorder %v710, 15
        %vm1002 = vcmp.eq.s32.totalorder %v711, 15
        %vm1003 = vcmp.eq.s32.totalorder %v712, 15
        %vm1004 = vcmp.eq.s32.totalorder %v713, 15
        %vm1005 = vcmp.eq.s32.totalorder %v714, 15
        %vm1006 = vcmp.eq.s32.totalorder %v715, 15
        %vm1007 = vcmp.eq.s32.totalorder %v716, 15
        %vm1008 = vcmp.eq.s32.totalorder %v717, 15
        %vm1009 = vcmp.eq.s32.totalorder %v718, 15
        %vm1010 = vcmp.eq.s32.totalorder %v719, 15
        %vm1011 = vcmp.eq.s32.totalorder %v720, 15
        %vm1012 = vcmp.eq.s32.totalorder %v721, 15
        %vm1013 = vcmp.eq.s32.totalorder %v722, 15
        %vm1014 = vcmp.eq.s32.totalorder %v723, 15
        %vm1015 = vcmp.eq.s32.totalorder %v724, 15
        %vm1016 = vcmp.eq.s32.totalorder %v725, 15
        %vm1017 = vcmp.eq.s32.totalorder %v726, 15
        %vm1018 = vcmp.eq.s32.totalorder %v727, 15
        %vm1019 = vcmp.eq.s32.totalorder %v728, 15
        %vm1020 = vcmp.eq.s32.totalorder %v729, 15
        %vm1021 = vcmp.eq.s32.totalorder %v730, 15
        %vm1022 = vcmp.eq.s32.totalorder %v731, 15
        %vm1023 = vcmp.eq.s32.totalorder %v732, 15
        %vm1024 = vcmp.eq.s32.totalorder %v733, 15
        %vm1025 = vcmp.eq.s32.totalorder %v734, 15
        %vm1026 = vcmp.eq.s32.totalorder %v735, 15
        %vm1027 = vcmp.eq.s32.totalorder %v736, 15
        %vm1028 = vcmp.eq.s32.totalorder %v737, 15
        %vm1029 = vcmp.eq.s32.totalorder %v738, 15
        %vm1030 = vcmp.eq.s32.totalorder %v739, 15
        %v1031 = vsel %vm999, 1, 0
        %v1032 = vsel %vm1000, 1, 0
        %v1033 = vsel %vm1001, 1, 0
        %v1034 = vsel %vm1002, 1, 0
        %v1035 = vsel %vm1003, 1, 0
        %v1036 = vsel %vm1004, 1, 0
        %v1037 = vsel %vm1005, 1, 0
        %v1038 = vsel %vm1006, 1, 0
        %v1039 = vsel %vm1007, 1, 0
        %v1040 = vsel %vm1008, 1, 0
        %v1041 = vsel %vm1009, 1, 0
        %v1042 = vsel %vm1010, 1, 0
        %v1043 = vsel %vm1011, 1, 0
        %v1044 = vsel %vm1012, 1, 0
        %v1045 = vsel %vm1013, 1, 0
        %v1046 = vsel %vm1014, 1, 0
        %v1047 = vsel %vm1015, 1, 0
        %v1048 = vsel %vm1016, 1, 0
        %v1049 = vsel %vm1017, 1, 0
        %v1050 = vsel %vm1018, 1, 0
        %v1051 = vsel %vm1019, 1, 0
        %v1052 = vsel %vm1020, 1, 0
        %v1053 = vsel %vm1021, 1, 0
        %v1054 = vsel %vm1022, 1, 0
        %v1055 = vsel %vm1023, 1, 0
        %v1056 = vsel %vm1024, 1, 0
        %v1057 = vsel %vm1025, 1, 0
        %v1058 = vsel %vm1026, 1, 0
        %v1059 = vsel %vm1027, 1, 0
        %v1060 = vsel %vm1028, 1, 0
        %v1061 = vsel %vm1029, 1, 0
        %v1062 = vsel %vm1030, 1, 0
        %vm1063 = vcmp.eq.s32.totalorder %v1031, 1
        %vm1064 = vcmp.eq.s32.totalorder %v1032, 1
        %vm1065 = vcmp.eq.s32.totalorder %v1033, 1
        %vm1066 = vcmp.eq.s32.totalorder %v1034, 1
        %vm1067 = vcmp.eq.s32.totalorder %v1035, 1
        %vm1068 = vcmp.eq.s32.totalorder %v1036, 1
        %vm1069 = vcmp.eq.s32.totalorder %v1037, 1
        %vm1070 = vcmp.eq.s32.totalorder %v1038, 1
        %vm1071 = vcmp.eq.s32.totalorder %v1039, 1
        %vm1072 = vcmp.eq.s32.totalorder %v1040, 1
        %vm1073 = vcmp.eq.s32.totalorder %v1041, 1
        %vm1074 = vcmp.eq.s32.totalorder %v1042, 1
        %vm1075 = vcmp.eq.s32.totalorder %v1043, 1
        %vm1076 = vcmp.eq.s32.totalorder %v1044, 1
        %vm1077 = vcmp.eq.s32.totalorder %v1045, 1
        %vm1078 = vcmp.eq.s32.totalorder %v1046, 1
        %vm1079 = vcmp.eq.s32.totalorder %v1047, 1
        %vm1080 = vcmp.eq.s32.totalorder %v1048, 1
        %vm1081 = vcmp.eq.s32.totalorder %v1049, 1
        %vm1082 = vcmp.eq.s32.totalorder %v1050, 1
        %vm1083 = vcmp.eq.s32.totalorder %v1051, 1
        %vm1084 = vcmp.eq.s32.totalorder %v1052, 1
        %vm1085 = vcmp.eq.s32.totalorder %v1053, 1
        %vm1086 = vcmp.eq.s32.totalorder %v1054, 1
        %vm1087 = vcmp.eq.s32.totalorder %v1055, 1
        %vm1088 = vcmp.eq.s32.totalorder %v1056, 1
        %vm1089 = vcmp.eq.s32.totalorder %v1057, 1
        %vm1090 = vcmp.eq.s32.totalorder %v1058, 1
        %vm1091 = vcmp.eq.s32.totalorder %v1059, 1
        %vm1092 = vcmp.eq.s32.totalorder %v1060, 1
        %vm1093 = vcmp.eq.s32.totalorder %v1061, 1
        %vm1094 = vcmp.eq.s32.totalorder %v1062, 1
        %vm1096 = vcmask 1046528
        %v1097 = vrot.slane %v290, 1
        %v1098 = vrot.slane %v291, 1
        %v1099 = vsel %vm1096, %v1097, %v1098
        %v1100 = vrot.slane %v292, 1
        %v1101 = vsel %vm1096, %v1098, %v1100
        %v1102 = vrot.slane %v293, 1
        %v1103 = vsel %vm1096, %v1100, %v1102
        %v1104 = vrot.slane %v294, 1
        %v1105 = vsel %vm1096, %v1102, %v1104
        %v1106 = vrot.slane %v295, 1
        %v1107 = vsel %vm1096, %v1104, %v1106
        %v1108 = vrot.slane %v296, 1
        %v1109 = vsel %vm1096, %v1106, %v1108
        %v1110 = vrot.slane %v297, 1
        %v1111 = vsel %vm1096, %v1108, %v1110
        %v1112 = vrot.slane %v298, 1
        %v1113 = vsel %vm1096, %v1110, %v1112
        %v1114 = vrot.slane %v299, 1
        %v1115 = vsel %vm1096, %v1112, %v1114
        %v1116 = vrot.slane %v300, 1
        %v1117 = vsel %vm1096, %v1114, %v1116
        %v1118 = vrot.slane %v301, 1
        %v1119 = vsel %vm1096, %v1116, %v1118
        %v1120 = vrot.slane %v302, 1
        %v1121 = vsel %vm1096, %v1118, %v1120
        %v1122 = vrot.slane %v303, 1
        %v1123 = vsel %vm1096, %v1120, %v1122
        %v1124 = vrot.slane %v304, 1
        %v1125 = vsel %vm1096, %v1122, %v1124
        %v1126 = vrot.slane %v305, 1
        %v1127 = vsel %vm1096, %v1124, %v1126
        %v1128 = vrot.slane %v306, 1
        %v1129 = vsel %vm1096, %v1126, %v1128
        %v1130 = vrot.slane %v307, 1
        %v1131 = vsel %vm1096, %v1128, %v1130
        %v1132 = vrot.slane %v308, 1
        %v1133 = vsel %vm1096, %v1130, %v1132
        %v1134 = vrot.slane %v309, 1
        %v1135 = vsel %vm1096, %v1132, %v1134
        %v1136 = vrot.slane %v310, 1
        %v1137 = vsel %vm1096, %v1134, %v1136
        %v1138 = vrot.slane %v311, 1
        %v1139 = vsel %vm1096, %v1136, %v1138
        %v1140 = vrot.slane %v312, 1
        %v1141 = vsel %vm1096, %v1138, %v1140
        %v1142 = vrot.slane %v313, 1
        %v1143 = vsel %vm1096, %v1140, %v1142
        %v1144 = vrot.slane %v314, 1
        %v1145 = vsel %vm1096, %v1142, %v1144
        %v1146 = vrot.slane %v315, 1
        %v1147 = vsel %vm1096, %v1144, %v1146
        %v1148 = vrot.slane %v316, 1
        %v1149 = vsel %vm1096, %v1146, %v1148
        %v1150 = vrot.slane %v317, 1
        %v1151 = vsel %vm1096, %v1148, %v1150
        %v1152 = vrot.slane %v318, 1
        %v1153 = vsel %vm1096, %v1150, %v1152
        %v1154 = vrot.slane %v319, 1
        %v1155 = vsel %vm1096, %v1152, %v1154
        %v1156 = vrot.slane %v320, 1
        %v1157 = vsel %vm1096, %v1154, %v1156
        %v1158 = vrot.slane %v321, 1
        %v1159 = vsel %vm1096, %v1156, %v1158
        %v1160 = vrot.slane %v322, 1
        %v1161 = vsel %vm1096, %v1158, %v1160
        %v1194 = vsel %vm1063, 0.0, %v1099
        %v1195 = vsel %vm1064, 0.0, %v1101
        %v1196 = vsel %vm1065, 0.0, %v1103
        %v1197 = vsel %vm1066, 0.0, %v1105
        %v1198 = vsel %vm1067, 0.0, %v1107
        %v1199 = vsel %vm1068, 0.0, %v1109
        %v1200 = vsel %vm1069, 0.0, %v1111
        %v1201 = vsel %vm1070, 0.0, %v1113
        %v1202 = vsel %vm1071, 0.0, %v1115
        %v1203 = vsel %vm1072, 0.0, %v1117
        %v1204 = vsel %vm1073, 0.0, %v1119
        %v1205 = vsel %vm1074, 0.0, %v1121
        %v1206 = vsel %vm1075, 0.0, %v1123
        %v1207 = vsel %vm1076, 0.0, %v1125
        %v1208 = vsel %vm1077, 0.0, %v1127
        %v1209 = vsel %vm1078, 0.0, %v1129
        %v1210 = vsel %vm1079, 0.0, %v1131
        %v1211 = vsel %vm1080, 0.0, %v1133
        %v1212 = vsel %vm1081, 0.0, %v1135
        %v1213 = vsel %vm1082, 0.0, %v1137
        %v1214 = vsel %vm1083, 0.0, %v1139
        %v1215 = vsel %vm1084, 0.0, %v1141
        %v1216 = vsel %vm1085, 0.0, %v1143
        %v1217 = vsel %vm1086, 0.0, %v1145
        %v1218 = vsel %vm1087, 0.0, %v1147
        %v1219 = vsel %vm1088, 0.0, %v1149
        %v1220 = vsel %vm1089, 0.0, %v1151
        %v1221 = vsel %vm1090, 0.0, %v1153
        %v1222 = vsel %vm1091, 0.0, %v1155
        %v1223 = vsel %vm1092, 0.0, %v1157
        %v1224 = vsel %vm1093, 0.0, %v1159
        %v1225 = vsel %vm1094, 0.0, %v1161
        %v1226 = vpack.c.bf16 %v968, %v967
        %v1227 = vpack.c.bf16 %v970, %v969
        %v1228 = vpack.c.bf16 %v972, %v971
        %v1229 = vpack.c.bf16 %v974, %v973
        %v1230 = vpack.c.bf16 %v976, %v975
        %v1231 = vpack.c.bf16 %v978, %v977
        %v1232 = vpack.c.bf16 %v980, %v979
        %v1233 = vpack.c.bf16 %v982, %v981
        %v1234 = vpack.c.bf16 %v984, %v983
        %v1235 = vpack.c.bf16 %v986, %v985
        %v1236 = vpack.c.bf16 %v988, %v987
        %v1237 = vpack.c.bf16 %v990, %v989
        %v1238 = vpack.c.bf16 %v992, %v991
        %v1239 = vpack.c.bf16 %v994, %v993
        %v1240 = vpack.c.bf16 %v996, %v995
        %v1241 = vpack.c.bf16 %v998, %v997
        %v1242 = vld [vmem:[%s2] sm:$0xf]
        %v1243 = vld [vmem:[%s2 + $0x4] sm:$0xf]
        %v1244 = vpack.c.bf16 %v223, %v222
        %v1245 = vpack.c.bf16 %v225, %v224
        %v1246 = vpack.c.bf16 %v227, %v226
        %v1247 = vpack.c.bf16 %v229, %v228
        %v1248 = vpack.c.bf16 %v231, %v230
        %v1249 = vpack.c.bf16 %v233, %v232
        %v1250 = vpack.c.bf16 %v235, %v234
        %v1251 = vpack.c.bf16 %v237, %v236
        %v1252 = vpack.c.bf16 %v239, %v238
        %v1253 = vpack.c.bf16 %v241, %v240
        %v1254 = vpack.c.bf16 %v243, %v242
        %v1255 = vpack.c.bf16 %v245, %v244
        %v1256 = vpack.c.bf16 %v247, %v246
        %v1257 = vpack.c.bf16 %v249, %v248
        %v1258 = vpack.c.bf16 %v251, %v250
        %v1259 = vpack.c.bf16 %v253, %v252
        %s1260 = scalar_lea.vmem %s2, 8
        %v1261 = vld [vmem:[%s1260] sm:$0xf]
        %v1262 = vld [vmem:[%s1260 + $0x4] sm:$0xf]
        %v1265 = vunpack.c.l.b16 %v1261
        %v1266 = vunpack.c.l.b16 %v1262
        %v1267 = vpack.c.b16 %v1266, %v1265
        %v1270 = vsel %vm254, %v1244, 0
        %v1273 = vsel %vm254, %v1245, 0
        %v1276 = vsel %vm254, %v1246, 0
        %v1279 = vsel %vm254, %v1247, 0
        %v1282 = vsel %vm254, %v1248, 0
        %v1285 = vsel %vm254, %v1249, 0
        %v1288 = vsel %vm254, %v1250, 0
        %v1291 = vsel %vm254, %v1251, 0
        %v1294 = vsel %vm254, %v1252, 0
        %v1297 = vsel %vm254, %v1253, 0
        %v1300 = vsel %vm254, %v1254, 0
        %v1303 = vsel %vm254, %v1255, 0
        %v1306 = vsel %vm254, %v1256, 0
        %v1309 = vsel %vm254, %v1257, 0
        %v1312 = vsel %vm254, %v1258, 0
        %v1315 = vsel %vm254, %v1259, 0
        %1317 = vmatprep.subr.bf16.mxu0 0
        %1318 = vmatpush1.bf16.msra.mxu0 %v1267
        %1319 = vmatprep.subr.bf16.mxu0 0
        %1320 = vmatpush1.bf16.msra.mxu0 0
        %1321 = vmatprep.subr.bf16.mxu0 0
        %1322 = vmatpush1.bf16.msra.mxu0 0
        %1323 = vmatprep.subr.bf16.mxu0 0
        %1324 = vmatpush1.bf16.msra.mxu0 0
        %1325 = vmatprep.subr.bf16.mxu0 0
        %1326 = vmatpush1.bf16.msra.mxu0 0
        %1327 = vmatprep.subr.bf16.mxu0 0
        %1328 = vmatpush1.bf16.msra.mxu0 0
        %1329 = vmatprep.subr.bf16.mxu0 0
        %1330 = vmatpush1.bf16.msra.mxu0 0
        %1331 = vmatprep.subr.bf16.mxu0 0
        %1332 = vmatpush1.bf16.msra.mxu0 0
        %1333 = vmatprep.subr.bf16.mxu0 0
        %1334 = vmatpush1.bf16.msra.mxu0 0
        %1335 = vmatprep.subr.bf16.mxu0 0
        %1336 = vmatpush1.bf16.msra.mxu0 0
        %1337 = vmatprep.subr.bf16.mxu0 0
        %1338 = vmatpush1.bf16.msra.mxu0 0
        %1339 = vmatprep.subr.bf16.mxu0 0
        %1340 = vmatpush1.bf16.msra.mxu0 0
        %1341 = vmatprep.subr.bf16.mxu0 0
        %1342 = vmatpush1.bf16.msra.mxu0 0
        %1343 = vmatprep.subr.bf16.mxu0 0
        %1344 = vmatpush1.bf16.msra.mxu0 0
        %1345 = vmatprep.subr.bf16.mxu0 0
        %1346 = vmatpush1.bf16.msra.mxu0 0
        %1347 = vmatprep.subr.bf16.mxu0 0
        %1348 = vmatpush1.bf16.msra.mxu0 0
        %1349 = vmatprep.mubr.bf16.mxu0 0
        %1350 = vmatmul.mubr.bf16.gmra.mrb[0].mxu0 %v1270
        %v1351 = vpop.f32.mrb[0].mxu0
        %v1352 = vadd.f32 0.0, %v1351
        %v1353 = vpop.f32.mrb[0].mxu0
        %v1354 = vpop.f32.mrb[0].mxu0
        %v1355 = vadd.f32 0.0, %v1354
        %v1356 = vpop.f32.mrb[0].mxu0
        %1357 = vmatprep.mubr.bf16.mxu0 0
        %1358 = vmatmul.mubr.bf16.gmra.mrb[0].mxu0 %v1273
        %v1359 = vpop.f32.mrb[0].mxu0
        %v1360 = vadd.f32 0.0, %v1359
        %v1361 = vpop.f32.mrb[0].mxu0
        %v1362 = vpop.f32.mrb[0].mxu0
        %v1363 = vadd.f32 0.0, %v1362
        %v1364 = vpop.f32.mrb[0].mxu0
        %1365 = vmatprep.mubr.bf16.mxu0 0
        %1366 = vmatmul.mubr.bf16.gmra.mrb[0].mxu0 %v1276
        %v1367 = vpop.f32.mrb[0].mxu0
        %v1368 = vadd.f32 0.0, %v1367
        %v1369 = vpop.f32.mrb[0].mxu0
        %v1370 = vpop.f32.mrb[0].mxu0
        %v1371 = vadd.f32 0.0, %v1370
        %v1372 = vpop.f32.mrb[0].mxu0
        %1373 = vmatprep.mubr.bf16.mxu0 0
        %1374 = vmatmul.mubr.bf16.gmra.mrb[0].mxu0 %v1279
        %v1375 = vpop.f32.mrb[0].mxu0
        %v1376 = vadd.f32 0.0, %v1375
        %v1377 = vpop.f32.mrb[0].mxu0
        %v1378 = vpop.f32.mrb[0].mxu0
        %v1379 = vadd.f32 0.0, %v1378
        %v1380 = vpop.f32.mrb[0].mxu0
        %1381 = vmatprep.mubr.bf16.mxu0 0
        %1382 = vmatmul.mubr.bf16.gmra.mrb[0].mxu0 %v1282
        %v1383 = vpop.f32.mrb[0].mxu0
        %v1384 = vadd.f32 0.0, %v1383
        %v1385 = vpop.f32.mrb[0].mxu0
        %v1386 = vpop.f32.mrb[0].mxu0
        %v1387 = vadd.f32 0.0, %v1386
        %v1388 = vpop.f32.mrb[0].mxu0
        %1389 = vmatprep.mubr.bf16.mxu0 0
        %1390 = vmatmul.mubr.bf16.gmra.mrb[0].mxu0 %v1285
        %v1391 = vpop.f32.mrb[0].mxu0
        %v1392 = vadd.f32 0.0, %v1391
        %v1393 = vpop.f32.mrb[0].mxu0
        %v1394 = vpop.f32.mrb[0].mxu0
        %v1395 = vadd.f32 0.0, %v1394
        %v1396 = vpop.f32.mrb[0].mxu0
        %1397 = vmatprep.mubr.bf16.mxu0 0
        %1398 = vmatmul.mubr.bf16.gmra.mrb[0].mxu0 %v1288
        %v1399 = vpop.f32.mrb[0].mxu0
        %v1400 = vadd.f32 0.0, %v1399
        %v1401 = vpop.f32.mrb[0].mxu0
        %v1402 = vpop.f32.mrb[0].mxu0
        %v1403 = vadd.f32 0.0, %v1402
        %v1404 = vpop.f32.mrb[0].mxu0
        %1405 = vmatprep.mubr.bf16.mxu0 0
        %1406 = vmatmul.mubr.bf16.gmra.mrb[0].mxu0 %v1291
        %v1407 = vpop.f32.mrb[0].mxu0
        %v1408 = vadd.f32 0.0, %v1407
        %v1409 = vpop.f32.mrb[0].mxu0
        %v1410 = vpop.f32.mrb[0].mxu0
        %v1411 = vadd.f32 0.0, %v1410
        %v1412 = vpop.f32.mrb[0].mxu0
        %1413 = vmatprep.mubr.bf16.mxu0 0
        %1414 = vmatmul.mubr.bf16.gmra.mrb[0].mxu0 %v1294
        %v1415 = vpop.f32.mrb[0].mxu0
        %v1416 = vadd.f32 0.0, %v1415
        %v1417 = vpop.f32.mrb[0].mxu0
        %v1418 = vpop.f32.mrb[0].mxu0
        %v1419 = vadd.f32 0.0, %v1418
        %v1420 = vpop.f32.mrb[0].mxu0
        %1421 = vmatprep.mubr.bf16.mxu0 0
        %1422 = vmatmul.mubr.bf16.gmra.mrb[0].mxu0 %v1297
        %v1423 = vpop.f32.mrb[0].mxu0
        %v1424 = vadd.f32 0.0, %v1423
        %v1425 = vpop.f32.mrb[0].mxu0
        %v1426 = vpop.f32.mrb[0].mxu0
        %v1427 = vadd.f32 0.0, %v1426
        %v1428 = vpop.f32.mrb[0].mxu0
        %1429 = vmatprep.mubr.bf16.mxu0 0
        %1430 = vmatmul.mubr.bf16.gmra.mrb[0].mxu0 %v1300
        %v1431 = vpop.f32.mrb[0].mxu0
        %v1432 = vadd.f32 0.0, %v1431
        %v1433 = vpop.f32.mrb[0].mxu0
        %v1434 = vpop.f32.mrb[0].mxu0
        %v1435 = vadd.f32 0.0, %v1434
        %v1436 = vpop.f32.mrb[0].mxu0
        %1437 = vmatprep.mubr.bf16.mxu0 0
        %1438 = vmatmul.mubr.bf16.gmra.mrb[0].mxu0 %v1303
        %v1439 = vpop.f32.mrb[0].mxu0
        %v1440 = vadd.f32 0.0, %v1439
        %v1441 = vpop.f32.mrb[0].mxu0
        %v1442 = vpop.f32.mrb[0].mxu0
        %v1443 = vadd.f32 0.0, %v1442
        %v1444 = vpop.f32.mrb[0].mxu0
        %1445 = vmatprep.mubr.bf16.mxu0 0
        %1446 = vmatmul.mubr.bf16.gmra.mrb[0].mxu0 %v1306
        %v1447 = vpop.f32.mrb[0].mxu0
        %v1448 = vadd.f32 0.0, %v1447
        %v1449 = vpop.f32.mrb[0].mxu0
        %v1450 = vpop.f32.mrb[0].mxu0
        %v1451 = vadd.f32 0.0, %v1450
        %v1452 = vpop.f32.mrb[0].mxu0
        %1453 = vmatprep.mubr.bf16.mxu0 0
        %1454 = vmatmul.mubr.bf16.gmra.mrb[0].mxu0 %v1309
        %v1455 = vpop.f32.mrb[0].mxu0
        %v1456 = vadd.f32 0.0, %v1455
        %v1457 = vpop.f32.mrb[0].mxu0
        %v1458 = vpop.f32.mrb[0].mxu0
        %v1459 = vadd.f32 0.0, %v1458
        %v1460 = vpop.f32.mrb[0].mxu0
        %1461 = vmatprep.mubr.bf16.mxu0 0
        %1462 = vmatmul.mubr.bf16.gmra.mrb[0].mxu0 %v1312
        %v1463 = vpop.f32.mrb[0].mxu0
        %v1464 = vadd.f32 0.0, %v1463
        %v1465 = vpop.f32.mrb[0].mxu0
        %v1466 = vpop.f32.mrb[0].mxu0
        %v1467 = vadd.f32 0.0, %v1466
        %v1468 = vpop.f32.mrb[0].mxu0
        %1469 = vmatprep.mubr.bf16.mxu0 0
        %1470 = vmatmul.mubr.bf16.gmra.mrb[0].mxu0 %v1315
        %v1471 = vpop.f32.mrb[0].mxu0
        %v1472 = vadd.f32 0.0, %v1471
        %v1473 = vpop.f32.mrb[0].mxu0
        %v1474 = vpop.f32.mrb[0].mxu0
        %v1475 = vadd.f32 0.0, %v1474
        %v1476 = vpop.f32.mrb[0].mxu0
        %1477 = vdwg.mxu0
        %v1480 = vunpack.c.l.b16 %v1242
        %v1481 = vunpack.c.l.b16 %v1243
        %v1482 = vpack.c.b16 %v1481, %v1480
        %v1485 = vsel %vm254, %v1226, 0
        %v1488 = vsel %vm254, %v1227, 0
        %v1491 = vsel %vm254, %v1228, 0
        %v1494 = vsel %vm254, %v1229, 0
        %v1497 = vsel %vm254, %v1230, 0
        %v1500 = vsel %vm254, %v1231, 0
        %v1503 = vsel %vm254, %v1232, 0
        %v1506 = vsel %vm254, %v1233, 0
        %v1509 = vsel %vm254, %v1234, 0
        %v1512 = vsel %vm254, %v1235, 0
        %v1515 = vsel %vm254, %v1236, 0
        %v1518 = vsel %vm254, %v1237, 0
        %v1521 = vsel %vm254, %v1238, 0
        %v1524 = vsel %vm254, %v1239, 0
        %v1527 = vsel %vm254, %v1240, 0
        %v1530 = vsel %vm254, %v1241, 0
        %1532 = vmatprep.subr.bf16.mxu0 0
        %1533 = vmatpush1.bf16.msra.mxu0 %v1482
        %1534 = vmatprep.subr.bf16.mxu0 0
        %1535 = vmatpush1.bf16.msra.mxu0 0
        %1536 = vmatprep.subr.bf16.mxu0 0
        %1537 = vmatpush1.bf16.msra.mxu0 0
        %1538 = vmatprep.subr.bf16.mxu0 0
        %1539 = vmatpush1.bf16.msra.mxu0 0
        %1540 = vmatprep.subr.bf16.mxu0 0
        %1541 = vmatpush1.bf16.msra.mxu0 0
        %1542 = vmatprep.subr.bf16.mxu0 0
        %1543 = vmatpush1.bf16.msra.mxu0 0
        %1544 = vmatprep.subr.bf16.mxu0 0
        %1545 = vmatpush1.bf16.msra.mxu0 0
        %1546 = vmatprep.subr.bf16.mxu0 0
        %1547 = vmatpush1.bf16.msra.mxu0 0
        %1548 = vmatprep.subr.bf16.mxu0 0
        %1549 = vmatpush1.bf16.msra.mxu0 0
        %1550 = vmatprep.subr.bf16.mxu0 0
        %1551 = vmatpush1.bf16.msra.mxu0 0
        %1552 = vmatprep.subr.bf16.mxu0 0
        %1553 = vmatpush1.bf16.msra.mxu0 0
        %1554 = vmatprep.subr.bf16.mxu0 0
        %1555 = vmatpush1.bf16.msra.mxu0 0
        %1556 = vmatprep.subr.bf16.mxu0 0
        %1557 = vmatpush1.bf16.msra.mxu0 0
        %1558 = vmatprep.subr.bf16.mxu0 0
        %1559 = vmatpush1.bf16.msra.mxu0 0
        %1560 = vmatprep.subr.bf16.mxu0 0
        %1561 = vmatpush1.bf16.msra.mxu0 0
        %1562 = vmatprep.subr.bf16.mxu0 0
        %1563 = vmatpush1.bf16.msra.mxu0 0
        %1564 = vmatprep.mubr.bf16.mxu0 0
        %1565 = vmatmul.mubr.bf16.gmra.mrb[0].mxu0 %v1485
        %v1566 = vpop.f32.mrb[0].mxu0
        %v1567 = vadd.f32 %v1352, %v1566
        %v1568 = vpop.f32.mrb[0].mxu0
        %v1569 = vpop.f32.mrb[0].mxu0
        %v1570 = vadd.f32 %v1355, %v1569
        %v1571 = vpop.f32.mrb[0].mxu0
        %1572 = vmatprep.mubr.bf16.mxu0 0
        %1573 = vmatmul.mubr.bf16.gmra.mrb[0].mxu0 %v1488
        %v1574 = vpop.f32.mrb[0].mxu0
        %v1575 = vadd.f32 %v1360, %v1574
        %v1576 = vpop.f32.mrb[0].mxu0
        %v1577 = vpop.f32.mrb[0].mxu0
        %v1578 = vadd.f32 %v1363, %v1577
        %v1579 = vpop.f32.mrb[0].mxu0
        %1580 = vmatprep.mubr.bf16.mxu0 0
        %1581 = vmatmul.mubr.bf16.gmra.mrb[0].mxu0 %v1491
        %v1582 = vpop.f32.mrb[0].mxu0
        %v1583 = vadd.f32 %v1368, %v1582
        %v1584 = vpop.f32.mrb[0].mxu0
        %v1585 = vpop.f32.mrb[0].mxu0
        %v1586 = vadd.f32 %v1371, %v1585
        %v1587 = vpop.f32.mrb[0].mxu0
        %1588 = vmatprep.mubr.bf16.mxu0 0
        %1589 = vmatmul.mubr.bf16.gmra.mrb[0].mxu0 %v1494
        %v1590 = vpop.f32.mrb[0].mxu0
        %v1591 = vadd.f32 %v1376, %v1590
        %v1592 = vpop.f32.mrb[0].mxu0
        %v1593 = vpop.f32.mrb[0].mxu0
        %v1594 = vadd.f32 %v1379, %v1593
        %v1595 = vpop.f32.mrb[0].mxu0
        %1596 = vmatprep.mubr.bf16.mxu0 0
        %1597 = vmatmul.mubr.bf16.gmra.mrb[0].mxu0 %v1497
        %v1598 = vpop.f32.mrb[0].mxu0
        %v1599 = vadd.f32 %v1384, %v1598
        %v1600 = vpop.f32.mrb[0].mxu0
        %v1601 = vpop.f32.mrb[0].mxu0
        %v1602 = vadd.f32 %v1387, %v1601
        %v1603 = vpop.f32.mrb[0].mxu0
        %1604 = vmatprep.mubr.bf16.mxu0 0
        %1605 = vmatmul.mubr.bf16.gmra.mrb[0].mxu0 %v1500
        %v1606 = vpop.f32.mrb[0].mxu0
        %v1607 = vadd.f32 %v1392, %v1606
        %v1608 = vpop.f32.mrb[0].mxu0
        %v1609 = vpop.f32.mrb[0].mxu0
        %v1610 = vadd.f32 %v1395, %v1609
        %v1611 = vpop.f32.mrb[0].mxu0
        %1612 = vmatprep.mubr.bf16.mxu0 0
        %1613 = vmatmul.mubr.bf16.gmra.mrb[0].mxu0 %v1503
        %v1614 = vpop.f32.mrb[0].mxu0
        %v1615 = vadd.f32 %v1400, %v1614
        %v1616 = vpop.f32.mrb[0].mxu0
        %v1617 = vpop.f32.mrb[0].mxu0
        %v1618 = vadd.f32 %v1403, %v1617
        %v1619 = vpop.f32.mrb[0].mxu0
        %1620 = vmatprep.mubr.bf16.mxu0 0
        %1621 = vmatmul.mubr.bf16.gmra.mrb[0].mxu0 %v1506
        %v1622 = vpop.f32.mrb[0].mxu0
        %v1623 = vadd.f32 %v1408, %v1622
        %v1624 = vpop.f32.mrb[0].mxu0
        %v1625 = vpop.f32.mrb[0].mxu0
        %v1626 = vadd.f32 %v1411, %v1625
        %v1627 = vpop.f32.mrb[0].mxu0
        %1628 = vmatprep.mubr.bf16.mxu0 0
        %1629 = vmatmul.mubr.bf16.gmra.mrb[0].mxu0 %v1509
        %v1630 = vpop.f32.mrb[0].mxu0
        %v1631 = vadd.f32 %v1416, %v1630
        %v1632 = vpop.f32.mrb[0].mxu0
        %v1633 = vpop.f32.mrb[0].mxu0
        %v1634 = vadd.f32 %v1419, %v1633
        %v1635 = vpop.f32.mrb[0].mxu0
        %1636 = vmatprep.mubr.bf16.mxu0 0
        %1637 = vmatmul.mubr.bf16.gmra.mrb[0].mxu0 %v1512
        %v1638 = vpop.f32.mrb[0].mxu0
        %v1639 = vadd.f32 %v1424, %v1638
        %v1640 = vpop.f32.mrb[0].mxu0
        %v1641 = vpop.f32.mrb[0].mxu0
        %v1642 = vadd.f32 %v1427, %v1641
        %v1643 = vpop.f32.mrb[0].mxu0
        %1644 = vmatprep.mubr.bf16.mxu0 0
        %1645 = vmatmul.mubr.bf16.gmra.mrb[0].mxu0 %v1515
        %v1646 = vpop.f32.mrb[0].mxu0
        %v1647 = vadd.f32 %v1432, %v1646
        %v1648 = vpop.f32.mrb[0].mxu0
        %v1649 = vpop.f32.mrb[0].mxu0
        %v1650 = vadd.f32 %v1435, %v1649
        %v1651 = vpop.f32.mrb[0].mxu0
        %1652 = vmatprep.mubr.bf16.mxu0 0
        %1653 = vmatmul.mubr.bf16.gmra.mrb[0].mxu0 %v1518
        %v1654 = vpop.f32.mrb[0].mxu0
        %v1655 = vadd.f32 %v1440, %v1654
        %v1656 = vpop.f32.mrb[0].mxu0
        %v1657 = vpop.f32.mrb[0].mxu0
        %v1658 = vadd.f32 %v1443, %v1657
        %v1659 = vpop.f32.mrb[0].mxu0
        %1660 = vmatprep.mubr.bf16.mxu0 0
        %1661 = vmatmul.mubr.bf16.gmra.mrb[0].mxu0 %v1521
        %v1662 = vpop.f32.mrb[0].mxu0
        %v1663 = vadd.f32 %v1448, %v1662
        %v1664 = vpop.f32.mrb[0].mxu0
        %v1665 = vpop.f32.mrb[0].mxu0
        %v1666 = vadd.f32 %v1451, %v1665
        %v1667 = vpop.f32.mrb[0].mxu0
        %1668 = vmatprep.mubr.bf16.mxu0 0
        %1669 = vmatmul.mubr.bf16.gmra.mrb[0].mxu0 %v1524
        %v1670 = vpop.f32.mrb[0].mxu0
        %v1671 = vadd.f32 %v1456, %v1670
        %v1672 = vpop.f32.mrb[0].mxu0
        %v1673 = vpop.f32.mrb[0].mxu0
        %v1674 = vadd.f32 %v1459, %v1673
        %v1675 = vpop.f32.mrb[0].mxu0
        %1676 = vmatprep.mubr.bf16.mxu0 0
        %1677 = vmatmul.mubr.bf16.gmra.mrb[0].mxu0 %v1527
        %v1678 = vpop.f32.mrb[0].mxu0
        %v1679 = vadd.f32 %v1464, %v1678
        %v1680 = vpop.f32.mrb[0].mxu0
        %v1681 = vpop.f32.mrb[0].mxu0
        %v1682 = vadd.f32 %v1467, %v1681
        %v1683 = vpop.f32.mrb[0].mxu0
        %1684 = vmatprep.mubr.bf16.mxu0 0
        %1685 = vmatmul.mubr.bf16.gmra.mrb[0].mxu0 %v1530
        %v1686 = vpop.f32.mrb[0].mxu0
        %v1687 = vadd.f32 %v1472, %v1686
        %v1688 = vpop.f32.mrb[0].mxu0
        %v1689 = vpop.f32.mrb[0].mxu0
        %v1690 = vadd.f32 %v1475, %v1689
        %v1691 = vpop.f32.mrb[0].mxu0
        %1692 = vdwg.mxu0
        %v1693 = vpack.c.bf16 %v1195, %v1194
        %v1694 = vpack.c.bf16 %v1197, %v1196
        %v1695 = vpack.c.bf16 %v1199, %v1198
        %v1696 = vpack.c.bf16 %v1201, %v1200
        %v1697 = vpack.c.bf16 %v1203, %v1202
        %v1698 = vpack.c.bf16 %v1205, %v1204
        %v1699 = vpack.c.bf16 %v1207, %v1206
        %v1700 = vpack.c.bf16 %v1209, %v1208
        %v1701 = vpack.c.bf16 %v1211, %v1210
        %v1702 = vpack.c.bf16 %v1213, %v1212
        %v1703 = vpack.c.bf16 %v1215, %v1214
        %v1704 = vpack.c.bf16 %v1217, %v1216
        %v1705 = vpack.c.bf16 %v1219, %v1218
        %v1706 = vpack.c.bf16 %v1221, %v1220
        %v1707 = vpack.c.bf16 %v1223, %v1222
        %v1708 = vpack.c.bf16 %v1225, %v1224
        %s1709 = scalar_lea.vmem %s2, 16
        %v1710 = vld [vmem:[%s1709] sm:$0xf]
        %v1711 = vld [vmem:[%s1709 + $0x4] sm:$0xf]
        %v1714 = vunpack.c.l.b16 %v1710
        %v1715 = vunpack.c.l.b16 %v1711
        %v1716 = vpack.c.b16 %v1715, %v1714
        %v1719 = vsel %vm254, %v1693, 0
        %v1722 = vsel %vm254, %v1694, 0
        %v1725 = vsel %vm254, %v1695, 0
        %v1728 = vsel %vm254, %v1696, 0
        %v1731 = vsel %vm254, %v1697, 0
        %v1734 = vsel %vm254, %v1698, 0
        %v1737 = vsel %vm254, %v1699, 0
        %v1740 = vsel %vm254, %v1700, 0
        %v1743 = vsel %vm254, %v1701, 0
        %v1746 = vsel %vm254, %v1702, 0
        %v1749 = vsel %vm254, %v1703, 0
        %v1752 = vsel %vm254, %v1704, 0
        %v1755 = vsel %vm254, %v1705, 0
        %v1758 = vsel %vm254, %v1706, 0
        %v1761 = vsel %vm254, %v1707, 0
        %v1764 = vsel %vm254, %v1708, 0
        %1766 = vmatprep.subr.bf16.mxu0 0
        %1767 = vmatpush1.bf16.msra.mxu0 %v1716
        %1768 = vmatprep.subr.bf16.mxu0 0
        %1769 = vmatpush1.bf16.msra.mxu0 0
        %1770 = vmatprep.subr.bf16.mxu0 0
        %1771 = vmatpush1.bf16.msra.mxu0 0
        %1772 = vmatprep.subr.bf16.mxu0 0
        %1773 = vmatpush1.bf16.msra.mxu0 0
        %1774 = vmatprep.subr.bf16.mxu0 0
        %1775 = vmatpush1.bf16.msra.mxu0 0
        %1776 = vmatprep.subr.bf16.mxu0 0
        %1777 = vmatpush1.bf16.msra.mxu0 0
        %1778 = vmatprep.subr.bf16.mxu0 0
        %1779 = vmatpush1.bf16.msra.mxu0 0
        %1780 = vmatprep.subr.bf16.mxu0 0
        %1781 = vmatpush1.bf16.msra.mxu0 0
        %1782 = vmatprep.subr.bf16.mxu0 0
        %1783 = vmatpush1.bf16.msra.mxu0 0
        %1784 = vmatprep.subr.bf16.mxu0 0
        %1785 = vmatpush1.bf16.msra.mxu0 0
        %1786 = vmatprep.subr.bf16.mxu0 0
        %1787 = vmatpush1.bf16.msra.mxu0 0
        %1788 = vmatprep.subr.bf16.mxu0 0
        %1789 = vmatpush1.bf16.msra.mxu0 0
        %1790 = vmatprep.subr.bf16.mxu0 0
        %1791 = vmatpush1.bf16.msra.mxu0 0
        %1792 = vmatprep.subr.bf16.mxu0 0
        %1793 = vmatpush1.bf16.msra.mxu0 0
        %1794 = vmatprep.subr.bf16.mxu0 0
        %1795 = vmatpush1.bf16.msra.mxu0 0
        %1796 = vmatprep.subr.bf16.mxu0 0
        %1797 = vmatpush1.bf16.msra.mxu0 0
        %1798 = vmatprep.mubr.bf16.mxu0 0
        %1799 = vmatmul.mubr.bf16.gmra.mrb[0].mxu0 %v1719
        %v1800 = vpop.f32.mrb[0].mxu0
        %v1801 = vadd.f32 0.0, %v1800
        %v1802 = vpop.f32.mrb[0].mxu0
        %v1803 = vpop.f32.mrb[0].mxu0
        %v1804 = vadd.f32 0.0, %v1803
        %v1805 = vpop.f32.mrb[0].mxu0
        %1806 = vmatprep.mubr.bf16.mxu0 0
        %1807 = vmatmul.mubr.bf16.gmra.mrb[0].mxu0 %v1722
        %v1808 = vpop.f32.mrb[0].mxu0
        %v1809 = vadd.f32 0.0, %v1808
        %v1810 = vpop.f32.mrb[0].mxu0
        %v1811 = vpop.f32.mrb[0].mxu0
        %v1812 = vadd.f32 0.0, %v1811
        %v1813 = vpop.f32.mrb[0].mxu0
        %1814 = vmatprep.mubr.bf16.mxu0 0
        %1815 = vmatmul.mubr.bf16.gmra.mrb[0].mxu0 %v1725
        %v1816 = vpop.f32.mrb[0].mxu0
        %v1817 = vadd.f32 0.0, %v1816
        %v1818 = vpop.f32.mrb[0].mxu0
        %v1819 = vpop.f32.mrb[0].mxu0
        %v1820 = vadd.f32 0.0, %v1819
        %v1821 = vpop.f32.mrb[0].mxu0
        %1822 = vmatprep.mubr.bf16.mxu0 0
        %1823 = vmatmul.mubr.bf16.gmra.mrb[0].mxu0 %v1728
        %v1824 = vpop.f32.mrb[0].mxu0
        %v1825 = vadd.f32 0.0, %v1824
        %v1826 = vpop.f32.mrb[0].mxu0
        %v1827 = vpop.f32.mrb[0].mxu0
        %v1828 = vadd.f32 0.0, %v1827
        %v1829 = vpop.f32.mrb[0].mxu0
        %1830 = vmatprep.mubr.bf16.mxu0 0
        %1831 = vmatmul.mubr.bf16.gmra.mrb[0].mxu0 %v1731
        %v1832 = vpop.f32.mrb[0].mxu0
        %v1833 = vadd.f32 0.0, %v1832
        %v1834 = vpop.f32.mrb[0].mxu0
        %v1835 = vpop.f32.mrb[0].mxu0
        %v1836 = vadd.f32 0.0, %v1835
        %v1837 = vpop.f32.mrb[0].mxu0
        %1838 = vmatprep.mubr.bf16.mxu0 0
        %1839 = vmatmul.mubr.bf16.gmra.mrb[0].mxu0 %v1734
        %v1840 = vpop.f32.mrb[0].mxu0
        %v1841 = vadd.f32 0.0, %v1840
        %v1842 = vpop.f32.mrb[0].mxu0
        %v1843 = vpop.f32.mrb[0].mxu0
        %v1844 = vadd.f32 0.0, %v1843
        %v1845 = vpop.f32.mrb[0].mxu0
        %1846 = vmatprep.mubr.bf16.mxu0 0
        %1847 = vmatmul.mubr.bf16.gmra.mrb[0].mxu0 %v1737
        %v1848 = vpop.f32.mrb[0].mxu0
        %v1849 = vadd.f32 0.0, %v1848
        %v1850 = vpop.f32.mrb[0].mxu0
        %v1851 = vpop.f32.mrb[0].mxu0
        %v1852 = vadd.f32 0.0, %v1851
        %v1853 = vpop.f32.mrb[0].mxu0
        %1854 = vmatprep.mubr.bf16.mxu0 0
        %1855 = vmatmul.mubr.bf16.gmra.mrb[0].mxu0 %v1740
        %v1856 = vpop.f32.mrb[0].mxu0
        %v1857 = vadd.f32 0.0, %v1856
        %v1858 = vpop.f32.mrb[0].mxu0
        %v1859 = vpop.f32.mrb[0].mxu0
        %v1860 = vadd.f32 0.0, %v1859
        %v1861 = vpop.f32.mrb[0].mxu0
        %1862 = vmatprep.mubr.bf16.mxu0 0
        %1863 = vmatmul.mubr.bf16.gmra.mrb[0].mxu0 %v1743
        %v1864 = vpop.f32.mrb[0].mxu0
        %v1865 = vadd.f32 0.0, %v1864
        %v1866 = vpop.f32.mrb[0].mxu0
        %v1867 = vpop.f32.mrb[0].mxu0
        %v1868 = vadd.f32 0.0, %v1867
        %v1869 = vpop.f32.mrb[0].mxu0
        %1870 = vmatprep.mubr.bf16.mxu0 0
        %1871 = vmatmul.mubr.bf16.gmra.mrb[0].mxu0 %v1746
        %v1872 = vpop.f32.mrb[0].mxu0
        %v1873 = vadd.f32 0.0, %v1872
        %v1874 = vpop.f32.mrb[0].mxu0
        %v1875 = vpop.f32.mrb[0].mxu0
        %v1876 = vadd.f32 0.0, %v1875
        %v1877 = vpop.f32.mrb[0].mxu0
        %1878 = vmatprep.mubr.bf16.mxu0 0
        %1879 = vmatmul.mubr.bf16.gmra.mrb[0].mxu0 %v1749
        %v1880 = vpop.f32.mrb[0].mxu0
        %v1881 = vadd.f32 0.0, %v1880
        %v1882 = vpop.f32.mrb[0].mxu0
        %v1883 = vpop.f32.mrb[0].mxu0
        %v1884 = vadd.f32 0.0, %v1883
        %v1885 = vpop.f32.mrb[0].mxu0
        %1886 = vmatprep.mubr.bf16.mxu0 0
        %1887 = vmatmul.mubr.bf16.gmra.mrb[0].mxu0 %v1752
        %v1888 = vpop.f32.mrb[0].mxu0
        %v1889 = vadd.f32 0.0, %v1888
        %v1890 = vpop.f32.mrb[0].mxu0
        %v1891 = vpop.f32.mrb[0].mxu0
        %v1892 = vadd.f32 0.0, %v1891
        %v1893 = vpop.f32.mrb[0].mxu0
        %1894 = vmatprep.mubr.bf16.mxu0 0
        %1895 = vmatmul.mubr.bf16.gmra.mrb[0].mxu0 %v1755
        %v1896 = vpop.f32.mrb[0].mxu0
        %v1897 = vadd.f32 0.0, %v1896
        %v1898 = vpop.f32.mrb[0].mxu0
        %v1899 = vpop.f32.mrb[0].mxu0
        %v1900 = vadd.f32 0.0, %v1899
        %v1901 = vpop.f32.mrb[0].mxu0
        %1902 = vmatprep.mubr.bf16.mxu0 0
        %1903 = vmatmul.mubr.bf16.gmra.mrb[0].mxu0 %v1758
        %v1904 = vpop.f32.mrb[0].mxu0
        %v1905 = vadd.f32 0.0, %v1904
        %v1906 = vpop.f32.mrb[0].mxu0
        %v1907 = vpop.f32.mrb[0].mxu0
        %v1908 = vadd.f32 0.0, %v1907
        %v1909 = vpop.f32.mrb[0].mxu0
        %1910 = vmatprep.mubr.bf16.mxu0 0
        %1911 = vmatmul.mubr.bf16.gmra.mrb[0].mxu0 %v1761
        %v1912 = vpop.f32.mrb[0].mxu0
        %v1913 = vadd.f32 0.0, %v1912
        %v1914 = vpop.f32.mrb[0].mxu0
        %v1915 = vpop.f32.mrb[0].mxu0
        %v1916 = vadd.f32 0.0, %v1915
        %v1917 = vpop.f32.mrb[0].mxu0
        %1918 = vmatprep.mubr.bf16.mxu0 0
        %1919 = vmatmul.mubr.bf16.gmra.mrb[0].mxu0 %v1764
        %v1920 = vpop.f32.mrb[0].mxu0
        %v1921 = vadd.f32 0.0, %v1920
        %v1922 = vpop.f32.mrb[0].mxu0
        %v1923 = vpop.f32.mrb[0].mxu0
        %v1924 = vadd.f32 0.0, %v1923
        %v1925 = vpop.f32.mrb[0].mxu0
        %1926 = vdwg.mxu0
        %v1927 = vadd.f32 %v1567, %v1801
        %v1928 = vadd.f32 %v1570, %v1804
        %v1929 = vadd.f32 %v1575, %v1809
        %v1930 = vadd.f32 %v1578, %v1812
        %v1931 = vadd.f32 %v1583, %v1817
        %v1932 = vadd.f32 %v1586, %v1820
        %v1933 = vadd.f32 %v1591, %v1825
        %v1934 = vadd.f32 %v1594, %v1828
        %v1935 = vadd.f32 %v1599, %v1833
        %v1936 = vadd.f32 %v1602, %v1836
        %v1937 = vadd.f32 %v1607, %v1841
        %v1938 = vadd.f32 %v1610, %v1844
        %v1939 = vadd.f32 %v1615, %v1849
        %v1940 = vadd.f32 %v1618, %v1852
        %v1941 = vadd.f32 %v1623, %v1857
        %v1942 = vadd.f32 %v1626, %v1860
        %v1943 = vadd.f32 %v1631, %v1865
        %v1944 = vadd.f32 %v1634, %v1868
        %v1945 = vadd.f32 %v1639, %v1873
        %v1946 = vadd.f32 %v1642, %v1876
        %v1947 = vadd.f32 %v1647, %v1881
        %v1948 = vadd.f32 %v1650, %v1884
        %v1949 = vadd.f32 %v1655, %v1889
        %v1950 = vadd.f32 %v1658, %v1892
        %v1951 = vadd.f32 %v1663, %v1897
        %v1952 = vadd.f32 %v1666, %v1900
        %v1953 = vadd.f32 %v1671, %v1905
        %v1954 = vadd.f32 %v1674, %v1908
        %v1955 = vadd.f32 %v1679, %v1913
        %v1956 = vadd.f32 %v1682, %v1916
        %v1957 = vadd.f32 %v1687, %v1921
        %v1958 = vadd.f32 %v1690, %v1924
        %v1959 = vld [vmem:[%s218] sm:$0xff]
        %v1960 = vld [vmem:[%s218 + $0x8] sm:$0xff]
        %v1961 = vld [vmem:[%s218 + $0x10] sm:$0xff]
        %v1962 = vld [vmem:[%s218 + $0x18] sm:$0xff]
        %v1963 = vld [vmem:[%s218 + $0x20] sm:$0xff]
        %v1964 = vld [vmem:[%s218 + $0x28] sm:$0xff]
        %v1965 = vld [vmem:[%s218 + $0x30] sm:$0xff]
        %v1966 = vld [vmem:[%s218 + $0x38] sm:$0xff]
        %v1967 = vld [vmem:[%s218 + $0x40] sm:$0xff]
        %v1968 = vld [vmem:[%s218 + $0x48] sm:$0xff]
        %v1969 = vld [vmem:[%s218 + $0x50] sm:$0xff]
        %v1970 = vld [vmem:[%s218 + $0x58] sm:$0xff]
        %v1971 = vld [vmem:[%s218 + $0x60] sm:$0xff]
        %v1972 = vld [vmem:[%s218 + $0x68] sm:$0xff]
        %v1973 = vld [vmem:[%s218 + $0x70] sm:$0xff]
        %v1974 = vld [vmem:[%s218 + $0x78] sm:$0xff]
        %v1975 = vld [vmem:[%s218 + $0x80] sm:$0xff]
        %v1976 = vld [vmem:[%s218 + $0x88] sm:$0xff]
        %v1977 = vld [vmem:[%s218 + $0x90] sm:$0xff]
        %v1978 = vld [vmem:[%s218 + $0x98] sm:$0xff]
        %v1979 = vld [vmem:[%s218 + $0xa0] sm:$0xff]
        %v1980 = vld [vmem:[%s218 + $0xa8] sm:$0xff]
        %v1981 = vld [vmem:[%s218 + $0xb0] sm:$0xff]
        %v1982 = vld [vmem:[%s218 + $0xb8] sm:$0xff]
        %v1983 = vld [vmem:[%s218 + $0xc0] sm:$0xff]
        %v1984 = vld [vmem:[%s218 + $0xc8] sm:$0xff]
        %v1985 = vld [vmem:[%s218 + $0xd0] sm:$0xff]
        %v1986 = vld [vmem:[%s218 + $0xd8] sm:$0xff]
        %v1987 = vld [vmem:[%s218 + $0xe0] sm:$0xff]
        %v1988 = vld [vmem:[%s218 + $0xe8] sm:$0xff]
        %v1989 = vld [vmem:[%s218 + $0xf0] sm:$0xff]
        %v1990 = vld [vmem:[%s218 + $0xf8] sm:$0xff]
        %v1991 = vlaneseq
        %v1992 = vand.u32 %v1991, 127
        %vm1993 = vcmp.lt.s32.totalorder %v1992, 0
        %v1994 = vsub.s32 0, %v1992
        %v1995 = vsel %vm1993, %v1994, %v1992
        %v1996 = vshrl.u32 %v1995, 1
        %v1997 = vand.u32 %v1995, 1
        %v1998 = vsub.s32 0, %v1997
        %v1999 = vsel %vm1993, %v1998, %v1997
        %vm2000 = vcmp.ne.s32.totalorder %v1999, 0
        %vm2001 = vcmp.lt.s32.totalorder %v1999, 0
        %vm2002 = vmand %vm2001, %vm2000
        %v2003 = vadd.s32 %v1999, 2
        %v2004 = vsel %vm2002, %v2003, %v1999
        %vm2005 = vcmp.eq.s32.totalorder %v2004, 0
        %2007 = vset.pattern.permute.xlu0 0
        %2008 = vperm.xlu0 %2007, %v1959
        %v2009 = vpop.permute.xlu0 %2008
        %2012 = vset.pattern.permute.xlu0 0
        %2013 = vperm.xlu0 %2012, %v1960
        %v2014 = vpop.permute.xlu0 %2013
        %2017 = vset.pattern.permute.xlu0 0
        %2018 = vperm.xlu0 %2017, %v1961
        %v2019 = vpop.permute.xlu0 %2018
        %2022 = vset.pattern.permute.xlu0 0
        %2023 = vperm.xlu0 %2022, %v1962
        %v2024 = vpop.permute.xlu0 %2023
        %2027 = vset.pattern.permute.xlu0 0
        %2028 = vperm.xlu0 %2027, %v1963
        %v2029 = vpop.permute.xlu0 %2028
        %2032 = vset.pattern.permute.xlu0 0
        %2033 = vperm.xlu0 %2032, %v1964
        %v2034 = vpop.permute.xlu0 %2033
        %2037 = vset.pattern.permute.xlu0 0
        %2038 = vperm.xlu0 %2037, %v1965
        %v2039 = vpop.permute.xlu0 %2038
        %2042 = vset.pattern.permute.xlu0 0
        %2043 = vperm.xlu0 %2042, %v1966
        %v2044 = vpop.permute.xlu0 %2043
        %2047 = vset.pattern.permute.xlu0 0
        %2048 = vperm.xlu0 %2047, %v1967
        %v2049 = vpop.permute.xlu0 %2048
        %2052 = vset.pattern.permute.xlu0 0
        %2053 = vperm.xlu0 %2052, %v1968
        %v2054 = vpop.permute.xlu0 %2053
        %2057 = vset.pattern.permute.xlu0 0
        %2058 = vperm.xlu0 %2057, %v1969
        %v2059 = vpop.permute.xlu0 %2058
        %2062 = vset.pattern.permute.xlu0 0
        %2063 = vperm.xlu0 %2062, %v1970
        %v2064 = vpop.permute.xlu0 %2063
        %2067 = vset.pattern.permute.xlu0 0
        %2068 = vperm.xlu0 %2067, %v1971
        %v2069 = vpop.permute.xlu0 %2068
        %2072 = vset.pattern.permute.xlu0 0
        %2073 = vperm.xlu0 %2072, %v1972
        %v2074 = vpop.permute.xlu0 %2073
        %2077 = vset.pattern.permute.xlu0 0
        %2078 = vperm.xlu0 %2077, %v1973
        %v2079 = vpop.permute.xlu0 %2078
        %2082 = vset.pattern.permute.xlu0 0
        %2083 = vperm.xlu0 %2082, %v1974
        %v2084 = vpop.permute.xlu0 %2083
        %2087 = vset.pattern.permute.xlu0 0
        %2088 = vperm.xlu0 %2087, %v1975
        %v2089 = vpop.permute.xlu0 %2088
        %2092 = vset.pattern.permute.xlu0 0
        %2093 = vperm.xlu0 %2092, %v1976
        %v2094 = vpop.permute.xlu0 %2093
        %2097 = vset.pattern.permute.xlu0 0
        %2098 = vperm.xlu0 %2097, %v1977
        %v2099 = vpop.permute.xlu0 %2098
        %2102 = vset.pattern.permute.xlu0 0
        %2103 = vperm.xlu0 %2102, %v1978
        %v2104 = vpop.permute.xlu0 %2103
        %2107 = vset.pattern.permute.xlu0 0
        %2108 = vperm.xlu0 %2107, %v1979
        %v2109 = vpop.permute.xlu0 %2108
        %2112 = vset.pattern.permute.xlu0 0
        %2113 = vperm.xlu0 %2112, %v1980
        %v2114 = vpop.permute.xlu0 %2113
        %2117 = vset.pattern.permute.xlu0 0
        %2118 = vperm.xlu0 %2117, %v1981
        %v2119 = vpop.permute.xlu0 %2118
        %2122 = vset.pattern.permute.xlu0 0
        %2123 = vperm.xlu0 %2122, %v1982
        %v2124 = vpop.permute.xlu0 %2123
        %2127 = vset.pattern.permute.xlu0 0
        %2128 = vperm.xlu0 %2127, %v1983
        %v2129 = vpop.permute.xlu0 %2128
        %2132 = vset.pattern.permute.xlu0 0
        %2133 = vperm.xlu0 %2132, %v1984
        %v2134 = vpop.permute.xlu0 %2133
        %2137 = vset.pattern.permute.xlu0 0
        %2138 = vperm.xlu0 %2137, %v1985
        %v2139 = vpop.permute.xlu0 %2138
        %2142 = vset.pattern.permute.xlu0 0
        %2143 = vperm.xlu0 %2142, %v1986
        %v2144 = vpop.permute.xlu0 %2143
        %2147 = vset.pattern.permute.xlu0 0
        %2148 = vperm.xlu0 %2147, %v1987
        %v2149 = vpop.permute.xlu0 %2148
        %2152 = vset.pattern.permute.xlu0 0
        %2153 = vperm.xlu0 %2152, %v1988
        %v2154 = vpop.permute.xlu0 %2153
        %2157 = vset.pattern.permute.xlu0 0
        %2158 = vperm.xlu0 %2157, %v1989
        %v2159 = vpop.permute.xlu0 %2158
        %2162 = vset.pattern.permute.xlu0 0
        %2163 = vperm.xlu0 %2162, %v1990
        %v2164 = vpop.permute.xlu0 %2163
        %2166 = vset.pattern.permute.xlu0 1
        %2167 = vperm.xlu0 %2166, %v1959
        %v2168 = vpop.permute.xlu0 %2167
        %2170 = vset.pattern.permute.xlu0 1
        %2171 = vperm.xlu0 %2170, %v1960
        %v2172 = vpop.permute.xlu0 %2171
        %2174 = vset.pattern.permute.xlu0 1
        %2175 = vperm.xlu0 %2174, %v1961
        %v2176 = vpop.permute.xlu0 %2175
        %2178 = vset.pattern.permute.xlu0 1
        %2179 = vperm.xlu0 %2178, %v1962
        %v2180 = vpop.permute.xlu0 %2179
        %2182 = vset.pattern.permute.xlu0 1
        %2183 = vperm.xlu0 %2182, %v1963
        %v2184 = vpop.permute.xlu0 %2183
        %2186 = vset.pattern.permute.xlu0 1
        %2187 = vperm.xlu0 %2186, %v1964
        %v2188 = vpop.permute.xlu0 %2187
        %2190 = vset.pattern.permute.xlu0 1
        %2191 = vperm.xlu0 %2190, %v1965
        %v2192 = vpop.permute.xlu0 %2191
        %2194 = vset.pattern.permute.xlu0 1
        %2195 = vperm.xlu0 %2194, %v1966
        %v2196 = vpop.permute.xlu0 %2195
        %2198 = vset.pattern.permute.xlu0 1
        %2199 = vperm.xlu0 %2198, %v1967
        %v2200 = vpop.permute.xlu0 %2199
        %2202 = vset.pattern.permute.xlu0 1
        %2203 = vperm.xlu0 %2202, %v1968
        %v2204 = vpop.permute.xlu0 %2203
        %2206 = vset.pattern.permute.xlu0 1
        %2207 = vperm.xlu0 %2206, %v1969
        %v2208 = vpop.permute.xlu0 %2207
        %2210 = vset.pattern.permute.xlu0 1
        %2211 = vperm.xlu0 %2210, %v1970
        %v2212 = vpop.permute.xlu0 %2211
        %2214 = vset.pattern.permute.xlu0 1
        %2215 = vperm.xlu0 %2214, %v1971
        %v2216 = vpop.permute.xlu0 %2215
        %2218 = vset.pattern.permute.xlu0 1
        %2219 = vperm.xlu0 %2218, %v1972
        %v2220 = vpop.permute.xlu0 %2219
        %2222 = vset.pattern.permute.xlu0 1
        %2223 = vperm.xlu0 %2222, %v1973
        %v2224 = vpop.permute.xlu0 %2223
        %2226 = vset.pattern.permute.xlu0 1
        %2227 = vperm.xlu0 %2226, %v1974
        %v2228 = vpop.permute.xlu0 %2227
        %2230 = vset.pattern.permute.xlu0 1
        %2231 = vperm.xlu0 %2230, %v1975
        %v2232 = vpop.permute.xlu0 %2231
        %2234 = vset.pattern.permute.xlu0 1
        %2235 = vperm.xlu0 %2234, %v1976
        %v2236 = vpop.permute.xlu0 %2235
        %2238 = vset.pattern.permute.xlu0 1
        %2239 = vperm.xlu0 %2238, %v1977
        %v2240 = vpop.permute.xlu0 %2239
        %2242 = vset.pattern.permute.xlu0 1
        %2243 = vperm.xlu0 %2242, %v1978
        %v2244 = vpop.permute.xlu0 %2243
        %2246 = vset.pattern.permute.xlu0 1
        %2247 = vperm.xlu0 %2246, %v1979
        %v2248 = vpop.permute.xlu0 %2247
        %2250 = vset.pattern.permute.xlu0 1
        %2251 = vperm.xlu0 %2250, %v1980
        %v2252 = vpop.permute.xlu0 %2251
        %2254 = vset.pattern.permute.xlu0 1
        %2255 = vperm.xlu0 %2254, %v1981
        %v2256 = vpop.permute.xlu0 %2255
        %2258 = vset.pattern.permute.xlu0 1
        %2259 = vperm.xlu0 %2258, %v1982
        %v2260 = vpop.permute.xlu0 %2259
        %2262 = vset.pattern.permute.xlu0 1
        %2263 = vperm.xlu0 %2262, %v1983
        %v2264 = vpop.permute.xlu0 %2263
        %2266 = vset.pattern.permute.xlu0 1
        %2267 = vperm.xlu0 %2266, %v1984
        %v2268 = vpop.permute.xlu0 %2267
        %2270 = vset.pattern.permute.xlu0 1
        %2271 = vperm.xlu0 %2270, %v1985
        %v2272 = vpop.permute.xlu0 %2271
        %2274 = vset.pattern.permute.xlu0 1
        %2275 = vperm.xlu0 %2274, %v1986
        %v2276 = vpop.permute.xlu0 %2275
        %2278 = vset.pattern.permute.xlu0 1
        %2279 = vperm.xlu0 %2278, %v1987
        %v2280 = vpop.permute.xlu0 %2279
        %2282 = vset.pattern.permute.xlu0 1
        %2283 = vperm.xlu0 %2282, %v1988
        %v2284 = vpop.permute.xlu0 %2283
        %2286 = vset.pattern.permute.xlu0 1
        %2287 = vperm.xlu0 %2286, %v1989
        %v2288 = vpop.permute.xlu0 %2287
        %2290 = vset.pattern.permute.xlu0 1
        %2291 = vperm.xlu0 %2290, %v1990
        %v2292 = vpop.permute.xlu0 %2291
        %v2294 = vsel %vm2005, %v2009, %v2168
        %v2295 = vsel %vm2005, %v2014, %v2172
        %v2296 = vsel %vm2005, %v2019, %v2176
        %v2297 = vsel %vm2005, %v2024, %v2180
        %v2298 = vsel %vm2005, %v2029, %v2184
        %v2299 = vsel %vm2005, %v2034, %v2188
        %v2300 = vsel %vm2005, %v2039, %v2192
        %v2301 = vsel %vm2005, %v2044, %v2196
        %v2302 = vsel %vm2005, %v2049, %v2200
        %v2303 = vsel %vm2005, %v2054, %v2204
        %v2304 = vsel %vm2005, %v2059, %v2208
        %v2305 = vsel %vm2005, %v2064, %v2212
        %v2306 = vsel %vm2005, %v2069, %v2216
        %v2307 = vsel %vm2005, %v2074, %v2220
        %v2308 = vsel %vm2005, %v2079, %v2224
        %v2309 = vsel %vm2005, %v2084, %v2228
        %v2310 = vsel %vm2005, %v2089, %v2232
        %v2311 = vsel %vm2005, %v2094, %v2236
        %v2312 = vsel %vm2005, %v2099, %v2240
        %v2313 = vsel %vm2005, %v2104, %v2244
        %v2314 = vsel %vm2005, %v2109, %v2248
        %v2315 = vsel %vm2005, %v2114, %v2252
        %v2316 = vsel %vm2005, %v2119, %v2256
        %v2317 = vsel %vm2005, %v2124, %v2260
        %v2318 = vsel %vm2005, %v2129, %v2264
        %v2319 = vsel %vm2005, %v2134, %v2268
        %v2320 = vsel %vm2005, %v2139, %v2272
        %v2321 = vsel %vm2005, %v2144, %v2276
        %v2322 = vsel %vm2005, %v2149, %v2280
        %v2323 = vsel %vm2005, %v2154, %v2284
        %v2324 = vsel %vm2005, %v2159, %v2288
        %v2325 = vsel %vm2005, %v2164, %v2292
        %v2326 = vadd.f32 %v1927, %v2294
        %v2327 = vadd.f32 %v1928, %v2295
        %v2328 = vadd.f32 %v1929, %v2296
        %v2329 = vadd.f32 %v1930, %v2297
        %v2330 = vadd.f32 %v1931, %v2298
        %v2331 = vadd.f32 %v1932, %v2299
        %v2332 = vadd.f32 %v1933, %v2300
        %v2333 = vadd.f32 %v1934, %v2301
        %v2334 = vadd.f32 %v1935, %v2302
        %v2335 = vadd.f32 %v1936, %v2303
        %v2336 = vadd.f32 %v1937, %v2304
        %v2337 = vadd.f32 %v1938, %v2305
        %v2338 = vadd.f32 %v1939, %v2306
        %v2339 = vadd.f32 %v1940, %v2307
        %v2340 = vadd.f32 %v1941, %v2308
        %v2341 = vadd.f32 %v1942, %v2309
        %v2342 = vadd.f32 %v1943, %v2310
        %v2343 = vadd.f32 %v1944, %v2311
        %v2344 = vadd.f32 %v1945, %v2312
        %v2345 = vadd.f32 %v1946, %v2313
        %v2346 = vadd.f32 %v1947, %v2314
        %v2347 = vadd.f32 %v1948, %v2315
        %v2348 = vadd.f32 %v1949, %v2316
        %v2349 = vadd.f32 %v1950, %v2317
        %v2350 = vadd.f32 %v1951, %v2318
        %v2351 = vadd.f32 %v1952, %v2319
        %v2352 = vadd.f32 %v1953, %v2320
        %v2353 = vadd.f32 %v1954, %v2321
        %v2354 = vadd.f32 %v1955, %v2322
        %v2355 = vadd.f32 %v1956, %v2323
        %v2356 = vadd.f32 %v1957, %v2324
        %v2357 = vadd.f32 %v1958, %v2325
        %vm2358 = vcmask 523264
        %v2359 = vsel %vm2358, %v2326, -inf
        %v2360 = vsel %vm2358, %v2327, -inf
        %v2361 = vmax.f32 %v2359, %v2360
        %v2362 = vrot.slane %v2361, 4
        %v2363 = vmax.f32 %v2361, %v2362
        %v2364 = vrot.slane %v2363, 2
        %v2365 = vmax.f32 %v2363, %v2364
        %v2366 = vrot.slane %v2365, 1
        %v2367 = vmax.f32 %v2365, %v2366
        %vm2368 = vcmp.eq.s32.totalorder %v324, 0
        %vm2369 = vcmp.eq.s32.totalorder %v325, 0
        %v2370 = vsel %vm2368, %v2367, 0.0
        %v2371 = vsel %vm2369, %v2367, 0.0
        %v2372 = vsel %vm2358, %v2328, -inf
        %v2373 = vsel %vm2358, %v2329, -inf
        %v2374 = vmax.f32 %v2372, %v2373
        %v2375 = vrot.slane %v2374, 4
        %v2376 = vmax.f32 %v2374, %v2375
        %v2377 = vrot.slane %v2376, 2
        %v2378 = vmax.f32 %v2376, %v2377
        %v2379 = vrot.slane %v2378, 1
        %v2380 = vmax.f32 %v2378, %v2379
        %vm2381 = vcmp.eq.s32.totalorder %v324, 1
        %vm2382 = vcmp.eq.s32.totalorder %v325, 1
        %v2383 = vsel %vm2381, %v2380, %v2370
        %v2384 = vsel %vm2382, %v2380, %v2371
        %v2385 = vsel %vm2358, %v2330, -inf
        %v2386 = vsel %vm2358, %v2331, -inf
        %v2387 = vmax.f32 %v2385, %v2386
        %v2388 = vrot.slane %v2387, 4
        %v2389 = vmax.f32 %v2387, %v2388
        %v2390 = vrot.slane %v2389, 2
        %v2391 = vmax.f32 %v2389, %v2390
        %v2392 = vrot.slane %v2391, 1
        %v2393 = vmax.f32 %v2391, %v2392
        %vm2394 = vcmp.eq.s32.totalorder %v324, 2
        %vm2395 = vcmp.eq.s32.totalorder %v325, 2
        %v2396 = vsel %vm2394, %v2393, %v2383
        %v2397 = vsel %vm2395, %v2393, %v2384
        %v2398 = vsel %vm2358, %v2332, -inf
        %v2399 = vsel %vm2358, %v2333, -inf
        %v2400 = vmax.f32 %v2398, %v2399
        %v2401 = vrot.slane %v2400, 4
        %v2402 = vmax.f32 %v2400, %v2401
        %v2403 = vrot.slane %v2402, 2
        %v2404 = vmax.f32 %v2402, %v2403
        %v2405 = vrot.slane %v2404, 1
        %v2406 = vmax.f32 %v2404, %v2405
        %vm2407 = vcmp.eq.s32.totalorder %v324, 3
        %vm2408 = vcmp.eq.s32.totalorder %v325, 3
        %v2409 = vsel %vm2407, %v2406, %v2396
        %v2410 = vsel %vm2408, %v2406, %v2397
        %v2411 = vsel %vm2358, %v2334, -inf
        %v2412 = vsel %vm2358, %v2335, -inf
        %v2413 = vmax.f32 %v2411, %v2412
        %v2414 = vrot.slane %v2413, 4
        %v2415 = vmax.f32 %v2413, %v2414
        %v2416 = vrot.slane %v2415, 2
        %v2417 = vmax.f32 %v2415, %v2416
        %v2418 = vrot.slane %v2417, 1
        %v2419 = vmax.f32 %v2417, %v2418
        %vm2420 = vcmp.eq.s32.totalorder %v324, 4
        %vm2421 = vcmp.eq.s32.totalorder %v325, 4
        %v2422 = vsel %vm2420, %v2419, %v2409
        %v2423 = vsel %vm2421, %v2419, %v2410
        %v2424 = vsel %vm2358, %v2336, -inf
        %v2425 = vsel %vm2358, %v2337, -inf
        %v2426 = vmax.f32 %v2424, %v2425
        %v2427 = vrot.slane %v2426, 4
        %v2428 = vmax.f32 %v2426, %v2427
        %v2429 = vrot.slane %v2428, 2
        %v2430 = vmax.f32 %v2428, %v2429
        %v2431 = vrot.slane %v2430, 1
        %v2432 = vmax.f32 %v2430, %v2431
        %vm2433 = vcmp.eq.s32.totalorder %v324, 5
        %vm2434 = vcmp.eq.s32.totalorder %v325, 5
        %v2435 = vsel %vm2433, %v2432, %v2422
        %v2436 = vsel %vm2434, %v2432, %v2423
        %v2437 = vsel %vm2358, %v2338, -inf
        %v2438 = vsel %vm2358, %v2339, -inf
        %v2439 = vmax.f32 %v2437, %v2438
        %v2440 = vrot.slane %v2439, 4
        %v2441 = vmax.f32 %v2439, %v2440
        %v2442 = vrot.slane %v2441, 2
        %v2443 = vmax.f32 %v2441, %v2442
        %v2444 = vrot.slane %v2443, 1
        %v2445 = vmax.f32 %v2443, %v2444
        %vm2446 = vcmp.eq.s32.totalorder %v324, 6
        %vm2447 = vcmp.eq.s32.totalorder %v325, 6
        %v2448 = vsel %vm2446, %v2445, %v2435
        %v2449 = vsel %vm2447, %v2445, %v2436
        %v2450 = vsel %vm2358, %v2340, -inf
        %v2451 = vsel %vm2358, %v2341, -inf
        %v2452 = vmax.f32 %v2450, %v2451
        %v2453 = vrot.slane %v2452, 4
        %v2454 = vmax.f32 %v2452, %v2453
        %v2455 = vrot.slane %v2454, 2
        %v2456 = vmax.f32 %v2454, %v2455
        %v2457 = vrot.slane %v2456, 1
        %v2458 = vmax.f32 %v2456, %v2457
        %vm2459 = vcmp.eq.s32.totalorder %v324, 7
        %vm2460 = vcmp.eq.s32.totalorder %v325, 7
        %v2461 = vsel %vm2459, %v2458, %v2448
        %v2462 = vsel %vm2460, %v2458, %v2449
        %v2463 = vsel %vm2358, %v2342, -inf
        %v2464 = vsel %vm2358, %v2343, -inf
        %v2465 = vmax.f32 %v2463, %v2464
        %v2466 = vrot.slane %v2465, 4
        %v2467 = vmax.f32 %v2465, %v2466
        %v2468 = vrot.slane %v2467, 2
        %v2469 = vmax.f32 %v2467, %v2468
        %v2470 = vrot.slane %v2469, 1
        %v2471 = vmax.f32 %v2469, %v2470
        %vm2472 = vcmp.eq.s32.totalorder %v324, 8
        %vm2473 = vcmp.eq.s32.totalorder %v325, 8
        %v2474 = vsel %vm2472, %v2471, %v2461
        %v2475 = vsel %vm2473, %v2471, %v2462
        %v2476 = vsel %vm2358, %v2344, -inf
        %v2477 = vsel %vm2358, %v2345, -inf
        %v2478 = vmax.f32 %v2476, %v2477
        %v2479 = vrot.slane %v2478, 4
        %v2480 = vmax.f32 %v2478, %v2479
        %v2481 = vrot.slane %v2480, 2
        %v2482 = vmax.f32 %v2480, %v2481
        %v2483 = vrot.slane %v2482, 1
        %v2484 = vmax.f32 %v2482, %v2483
        %vm2485 = vcmp.eq.s32.totalorder %v324, 9
        %vm2486 = vcmp.eq.s32.totalorder %v325, 9
        %v2487 = vsel %vm2485, %v2484, %v2474
        %v2488 = vsel %vm2486, %v2484, %v2475
        %v2489 = vsel %vm2358, %v2346, -inf
        %v2490 = vsel %vm2358, %v2347, -inf
        %v2491 = vmax.f32 %v2489, %v2490
        %v2492 = vrot.slane %v2491, 4
        %v2493 = vmax.f32 %v2491, %v2492
        %v2494 = vrot.slane %v2493, 2
        %v2495 = vmax.f32 %v2493, %v2494
        %v2496 = vrot.slane %v2495, 1
        %v2497 = vmax.f32 %v2495, %v2496
        %vm2498 = vcmp.eq.s32.totalorder %v324, 10
        %vm2499 = vcmp.eq.s32.totalorder %v325, 10
        %v2500 = vsel %vm2498, %v2497, %v2487
        %v2501 = vsel %vm2499, %v2497, %v2488
        %v2502 = vsel %vm2358, %v2348, -inf
        %v2503 = vsel %vm2358, %v2349, -inf
        %v2504 = vmax.f32 %v2502, %v2503
        %v2505 = vrot.slane %v2504, 4
        %v2506 = vmax.f32 %v2504, %v2505
        %v2507 = vrot.slane %v2506, 2
        %v2508 = vmax.f32 %v2506, %v2507
        %v2509 = vrot.slane %v2508, 1
        %v2510 = vmax.f32 %v2508, %v2509
        %vm2511 = vcmp.eq.s32.totalorder %v324, 11
        %vm2512 = vcmp.eq.s32.totalorder %v325, 11
        %v2513 = vsel %vm2511, %v2510, %v2500
        %v2514 = vsel %vm2512, %v2510, %v2501
        %v2515 = vsel %vm2358, %v2350, -inf
        %v2516 = vsel %vm2358, %v2351, -inf
        %v2517 = vmax.f32 %v2515, %v2516
        %v2518 = vrot.slane %v2517, 4
        %v2519 = vmax.f32 %v2517, %v2518
        %v2520 = vrot.slane %v2519, 2
        %v2521 = vmax.f32 %v2519, %v2520
        %v2522 = vrot.slane %v2521, 1
        %v2523 = vmax.f32 %v2521, %v2522
        %vm2524 = vcmp.eq.s32.totalorder %v324, 12
        %vm2525 = vcmp.eq.s32.totalorder %v325, 12
        %v2526 = vsel %vm2524, %v2523, %v2513
        %v2527 = vsel %vm2525, %v2523, %v2514
        %v2528 = vsel %vm2358, %v2352, -inf
        %v2529 = vsel %vm2358, %v2353, -inf
        %v2530 = vmax.f32 %v2528, %v2529
        %v2531 = vrot.slane %v2530, 4
        %v2532 = vmax.f32 %v2530, %v2531
        %v2533 = vrot.slane %v2532, 2
        %v2534 = vmax.f32 %v2532, %v2533
        %v2535 = vrot.slane %v2534, 1
        %v2536 = vmax.f32 %v2534, %v2535
        %vm2537 = vcmp.eq.s32.totalorder %v324, 13
        %vm2538 = vcmp.eq.s32.totalorder %v325, 13
        %v2539 = vsel %vm2537, %v2536, %v2526
        %v2540 = vsel %vm2538, %v2536, %v2527
        %v2541 = vsel %vm2358, %v2354, -inf
        %v2542 = vsel %vm2358, %v2355, -inf
        %v2543 = vmax.f32 %v2541, %v2542
        %v2544 = vrot.slane %v2543, 4
        %v2545 = vmax.f32 %v2543, %v2544
        %v2546 = vrot.slane %v2545, 2
        %v2547 = vmax.f32 %v2545, %v2546
        %v2548 = vrot.slane %v2547, 1
        %v2549 = vmax.f32 %v2547, %v2548
        %vm2550 = vcmp.eq.s32.totalorder %v324, 14
        %vm2551 = vcmp.eq.s32.totalorder %v325, 14
        %v2552 = vsel %vm2550, %v2549, %v2539
        %v2553 = vsel %vm2551, %v2549, %v2540
        %v2554 = vsel %vm2358, %v2356, -inf
        %v2555 = vsel %vm2358, %v2357, -inf
        %v2556 = vmax.f32 %v2554, %v2555
        %v2557 = vrot.slane %v2556, 4
        %v2558 = vmax.f32 %v2556, %v2557
        %v2559 = vrot.slane %v2558, 2
        %v2560 = vmax.f32 %v2558, %v2559
        %v2561 = vrot.slane %v2560, 1
        %v2562 = vmax.f32 %v2560, %v2561
        %vm2563 = vcmp.eq.s32.totalorder %v324, 15
        %vm2564 = vcmp.eq.s32.totalorder %v325, 15
        %v2565 = vsel %vm2563, %v2562, %v2552
        %v2566 = vsel %vm2564, %v2562, %v2553
        %v2567 = vld [vmem:[%s3] sm:$0x1]
        %v2569 = vlaneseq
        %v2570 = vshrl.u32 %v2569, 7
        %v2571 = vsub.s32 0, %v2570
        %v2572 = vrot.slane %v2567, %v2571
        %v2574 = vadd.f32 %v2565, %v2572
        %v2575 = vadd.f32 %v2566, %v2572
        %v2576 = vsub.f32 %v2574, 100.0
        %v2577 = vsub.f32 %v2575, 100.0
        %v2578 = vmax.f32 %v2576, 0.0
        %v2579 = vmax.f32 %v2577, 0.0
        %2580 = vst.msk [vmem:[%s207] sm:$0xff] %vm2358, %v2578
        %2581 = vst.msk [vmem:[%s207 + $0x8] sm:$0xff] %vm2358, %v2579
        %s2582 = sand.u32 %s120, 1
        %s2583 = scalar_lea.sflag [#allocation4], %s2582
        %s2584 = sand.u32 %s120, 1
        %s2585 = smul.addr %s2584, 16
        %s2586 = scalar_lea.vmem [#allocation3], %s2585
        // Predicated region
        $region37: #{tpu_custom_call.1} parent=35 // pred_check
          %p2587 = pneg %p130
        $region38: #{tpu_custom_call.1} parent=35 // pred_check_branch
          %2589 = sbr.rel (%p2587) target = $region40
        $region39: #{tpu_custom_call.1} parent=35 // pred_region
          %s2590 = smul.u32 2, %s18
          %s2592 = ssub.s32 256, 256
          %2593 = vsyncadd %s2583, %s2592
          %s2594 = smul.addr %s2590, 128
          %s2595 = scalar_lea.hbm %s4, %s2594
          %s2596 = sshll.u32 %s2586, 4
          %s2597 = int_to_ptr.vmem [resolvable:$true] %s2596
          %2602 = dma.vmem_to_hbm [thread:$0]  %s2597, 256, %s2595, %s2583, 128, 128, 8
        $region40: #{tpu_custom_call.1} parent=35 // pred_fallthru
          _
      $region36: #{tpu_custom_call.1} parent=5 // pred_fallthru
        _
      %p2603 = scmp.le.s32.totalorder 2, %s13
      // Predicated region
      $region41: #{tpu_custom_call.1} parent=5 // pred_check
        %p2604 = pneg %p2603
      $region42: #{tpu_custom_call.1} parent=5 // pred_check_branch
        %2606 = sbr.rel (%p2604) target = $region44
      $region43: #{tpu_custom_call.1} parent=5 // pred_region
        %s2607 = ssub.s32 %s13, 2
        // Predicated region
        $region45: #{tpu_custom_call.1} parent=43 // pred_check
          %p2608 = pneg %p136
        $region46: #{tpu_custom_call.1} parent=43 // pred_check_branch
          %2610 = sbr.rel (%p2608) target = $region48
        $region47: #{tpu_custom_call.1} parent=43 // pred_region
          %s2611 = sand.u32 %s121, 1
          %s2612 = scalar_lea.sflag [#allocation4], %s2611
          %s2613 = sand.u32 %s121, 1
          %s2614 = smul.addr %s2613, 16
          %s2615 = scalar_lea.vmem [#allocation3], %s2614
          %2616 = dma.done %s2612, 256
        $region48: #{tpu_custom_call.1} parent=43 // pred_fallthru
          _
      $region44: #{tpu_custom_call.1} parent=5 // pred_fallthru
        _
    $region6: #{tpu_custom_call.1} parent=1 // loop_footer
      %s17 = sadd.s32 1, %s13
    $region7: #{tpu_custom_call.1} parent=1 // loop_footer_branch
      %12 = sbr.rel target = $region3
    $region8: #{tpu_custom_call.1} parent=1 // loop_exit
      _
    %2617 = vsyncpa [#allocation4], 1
    %s2618 = scalar_lea.sflag [#allocation4], 1
    %2619 = vsyncpa %s2618, 1

</llo_original>
